<compile_context>
chip_gen: v7x
topology: tpu7x:2x2x1
jax: 0.10.0
libtpu: 0.0.40
codegen_flags: <defaults>
</compile_context>

<pallas_src>
import functools

import numpy as np
import jax
import jax.numpy as jnp
from jax import lax
from jax.experimental import pallas as pl
from jax.experimental.pallas import tpu as pltpu

KERNEL_SIZE = 7
PAD = KERNEL_SIZE // 2


def _vmem_capacity_bytes():
    try:
        info = pltpu.get_tpu_info()
        cap = int(getattr(info, "vmem_capacity_bytes", 0) or 0)
        if cap > 0:
            return cap
    except Exception:
        pass
    return 64 * 1024 * 1024  # conservative default (v7x per-TC VMEM)


def _pick_divisor(n, cap, prefer_multiple=1):
    """Largest divisor of n that is <= cap, preferring multiples of
    `prefer_multiple` (or n itself) for (8,128)-friendly tiling."""
    cap = max(1, min(n, cap))
    best = 1
    for d in range(cap, 0, -1):
        if n % d == 0:
            if d == n or d % prefer_multiple == 0:
                return d
            if best == 1:
                best = d
    return best


def _spatial_attention_kernel(w_ref, x_ref, o_ref, slab_ref, *, nb, H, W, E, chunk):
    # w_ref    : (2*K*K,) f32 SMEM  — folded conv weights (avg half pre-scaled by 1/C)
    # x_ref    : (nb, tc, H*W) VMEM — one (batch-tile, channel-tile) block, lane-dense
    # o_ref    : (nb, 1, H*W) VMEM  — lane-dense output tile (written on last channel step)
    # slab_ref : (2, nb, L) f32 VMEM scratch, L = H*W + 2*E.
    #            Interior [E, E+H*W) holds the running channel sum (ch 0) / max (ch 1);
    #            the two E-wide zero end strips double as the top/bottom conv padding.
    K = KERNEL_SIZE
    HW = H * W
    L = HW + 2 * E
    Ew = PAD * (W + 1)  # farthest a conv tap can reach past an output position (flat index)
    ci = pl.program_id(1)

    @pl.when(ci == 0)
    def _init():
        # Channel 0 (sum): interior must start at 0 anyway -> one full zero pass.
        slab_ref[0, :, :] = jnp.zeros((nb, L), jnp.float32)
        # Channel 1 (max): zero only the padding strips, -inf in the interior.
        slab_ref[1, :, 0:E] = jnp.zeros((nb, E), jnp.float32)
        slab_ref[1, :, E + HW:E + HW + E] = jnp.zeros((nb, E), jnp.float32)
        slab_ref[1, :, E:E + HW] = jnp.full((nb, HW), -jnp.inf, jnp.float32)

    # Fused, lane-dense channel reduction of this block: one whole-block load,
    # one sum / one max over the channel (sublane) axis, one aligned RMW each
    # (E is a multiple of 128, so the interior view starts lane-aligned).
    xf = x_ref[...].astype(jnp.float32)                       # (nb, tc, HW)
    slab_ref[0, :, E:E + HW] = slab_ref[0, :, E:E + HW] + jnp.sum(xf, axis=1)
    slab_ref[1, :, E:E + HW] = jnp.maximum(slab_ref[1, :, E:E + HW],
                                           jnp.max(xf, axis=1))

    @pl.when(ci == pl.num_programs(1) - 1)
    def _finalize():
        pow2 = (W & (W - 1)) == 0
        n_chunks = -(-HW // chunk)
        wlen = chunk + 2 * Ew
        for c in range(n_chunks):
            s = min(c * chunk, HW - chunk)        # clamped last chunk (overlap is idempotent)
            wstart = E + s - Ew
            # One lane-dense window load per conv input channel; all 98 taps are
            # in-register lane shifts of these two windows (no further VMEM traffic).
            win0 = slab_ref[0, :, wstart:wstart + wlen]       # (nb, wlen) f32
            win1 = slab_ref[1, :, wstart:wstart + wlen]
            # Column index of each output position in its image row; left/right
            # "same"-padding validity depends only on kw, so it is applied once per kw.
            q = s + lax.broadcasted_iota(jnp.int32, (1, chunk), 1)
            col = (q & (W - 1)) if pow2 else (q % W)
            acc = jnp.zeros((nb, chunk), jnp.float32)
            for kw in range(K):
                # Independent accumulators (one per conv input channel) break the
                # serial 98-tap dependence chain; summed once per kw.
                a0 = jnp.zeros((nb, chunk), jnp.float32)
                a1 = jnp.zeros((nb, chunk), jnp.float32)
                for kh in range(K):
                    off = Ew + (kh - PAD) * W + (kw - PAD)
                    a0 = a0 + w_ref[kh * K + kw] * win0[:, off:off + chunk]
                    a1 = a1 + w_ref[K * K + kh * K + kw] * win1[:, off:off + chunk]
                t = a0 + a1
                if kw != PAD:
                    lo = PAD - kw
                    valid = jnp.logical_and(col >= lo, col < W + lo)
                    t = t * valid.astype(jnp.float32)
                acc = acc + t
            o_ref[:, 0, s:s + chunk] = jax.nn.sigmoid(acc).astype(o_ref.dtype)


def spatial_attention(x, weight, *, batch_block=None, channel_block=None):
    """x: (N, C, H, W), weight: (1, 2, K, K) -> (N, 1, H, W)."""
    N, C, H, W = x.shape
    K = KERNEL_SIZE
    assert weight.shape == (1, 2, K, K)
    HW = H * W
    itemsize = np.dtype(x.dtype).itemsize

    # Flat-padded slab geometry: interior starts at a 128-lane-aligned offset E
    # that is at least PAD*(W+1) (the farthest any conv tap reaches).
    Ew = PAD * (W + 1)
    E = ((Ew + 127) // 128) * 128
    L = HW + 2 * E

    # Generation-aware VMEM budgeting: ~16 MiB/input block on 128 MiB v5e/v6e,
    # ~8 MiB on 64 MiB v7x (x2 for double-buffering), scoped limit at 3/4 of VMEM.
    vmem_cap = _vmem_capacity_bytes()
    in_budget = max(1 << 20, vmem_cap // 8)
    vmem_limit = int((vmem_cap * 3) // 4)

    # Channel tile: as large as the budget allows (prefer (8,*)-friendly tiles).
    if channel_block is None:
        channel_block = _pick_divisor(
            C, max(1, in_budget // max(1, HW * itemsize)), prefer_multiple=8)
    tc = channel_block
    assert C % tc == 0, "channel_block must divide C"
    # TODO(synk): support a masked remainder channel/batch block for prime-ish N/C
    # instead of degrading to tile size 1.

    # Batch tile: fill the input-block budget, bounded by the finalize/slab working
    # set, and keep >= 2 batch grid steps so both v7x TensorCores get work.
    if batch_block is None:
        nb_budget = max(1, in_budget // max(1, tc * HW * itemsize))
        nb_finalize = max(1, (2 * 1024 * 1024) // max(1, HW * 4))
        nb_parallel = max(1, N // 2)
        batch_block = _pick_divisor(N, min(nb_budget, nb_finalize, nb_parallel))
    nb = batch_block
    assert N % nb == 0, "batch_block must divide N"

    # Finalize chunk along the flat H*W axis: bounds vreg pressure of the 98-tap conv.
    target = max(128, 8192 // nb)
    if HW <= target:
        chunk = HW
    else:
        chunk = min(HW, max(128, (target // 128) * 128))

    # Fold 1/C into the "avg" half of the conv weight so the kernel only keeps the
    # raw channel sum (one-time 98-element op).
    w = weight.astype(jnp.float32)
    w_folded = jnp.concatenate([w[:, 0:1] / float(C), w[:, 1:2]], axis=1)
    w_flat = w_folded.reshape(-1)                      # (2*K*K,)

    x_flat = x.reshape(N, C, HW)                       # lane-dense reduction layout

    kernel = functools.partial(_spatial_attention_kernel,
                               nb=nb, H=H, W=W, E=E, chunk=chunk)

    out_flat = pl.pallas_call(
        kernel,
        out_shape=jax.ShapeDtypeStruct((N, 1, HW), x.dtype),
        grid_spec=pltpu.PrefetchScalarGridSpec(
            num_scalar_prefetch=0,
            grid=(N // nb, C // tc),
            in_specs=[
                # Conv weights: small scalar table, whole array in SMEM.
                pl.BlockSpec(memory_space=pltpu.MemorySpace.SMEM),
                # One (batch-tile, channel-tile) block per grid step, H*W on lanes.
                pl.BlockSpec((nb, tc, HW), lambda bi, ci: (bi, ci, 0)),
            ],
            out_specs=pl.BlockSpec((nb, 1, HW), lambda bi, ci: (bi, 0, 0)),
            scratch_shapes=[
                # Running channel sum/max embedded in the flat-padded conv slab.
                pltpu.VMEM((2, nb, L), jnp.float32),
            ],
        ),
        compiler_params=pltpu.CompilerParams(
            dimension_semantics=("parallel", "arbitrary"),
            vmem_limit_bytes=vmem_limit,
        ),
    )(w_flat, x_flat)

    return out_flat.reshape(N, 1, H, W)


def reference_forward(x, weight):
    """Plain-JAX reference matching the PyTorch module."""
    avg = jnp.mean(x, axis=1, keepdims=True)
    mx = jnp.max(x, axis=1, keepdims=True)
    stuff = jnp.concatenate([avg, mx], axis=1)
    conv = jax.lax.conv_general_dilated(
        stuff, weight, window_strides=(1, 1), padding="SAME",
        dimension_numbers=("NCHW", "OIHW", "NCHW"))
    return jax.nn.sigmoid(conv)


if __name__ == "__main__":
    key = jax.random.PRNGKey(0)
    k_w, k_x = jax.random.split(key)

    # Conv weight shape (1, 2, 7, 7), bias=False — matches
    # nn.Conv2d(2, 1, 7, padding=3, bias=False).
    fan_in = 2 * KERNEL_SIZE * KERNEL_SIZE
    bound = 1.0 / np.sqrt(fan_in)
    weight = jax.random.uniform(
        k_w, (1, 2, KERNEL_SIZE, KERNEL_SIZE),
        minval=-bound, maxval=bound, dtype=jnp.float32)

    # Small input consistent with the module's forward: (N, C, H, W).
    x = jax.random.normal(k_x, (2, 4, 16, 16), dtype=jnp.float32)

    out = jax.block_until_ready(spatial_attention(x, weight))
    ref = jax.block_until_ready(reference_forward(x, weight))
    np.testing.assert_allclose(np.asarray(out), np.asarray(ref),
                               rtol=1e-4, atol=1e-5)

    print("KERNEL_OK")
</pallas_src>

<mosaic_0001>
module attributes {stable_mosaic.version = 11 : i64} {
  func.func @_spatial_attention_kernel(%arg0: i32, %arg1: i32, %arg2: memref<98xf32, #tpu.memory_space<smem>>, %arg3: memref<1x4x256xf32, #tpu.memory_space<vmem>>, %arg4: memref<1x1x256xf32, #tpu.memory_space<vmem>>, %arg5: memref<2x1x512xf32, #tpu.memory_space<vmem>>) attributes {dimension_semantics = [#tpu.dimension_semantics<parallel>, #tpu.dimension_semantics<arbitrary>], iteration_bounds = array<i64: 2, 1>, scalar_prefetch = 0 : i64, scratch_operands = 1 : i64, tpu.core_type = #tpu.core_type<tc>, window_params = [{transform_indices = @transform_0, window_bounds = array<i64: 98>}, {transform_indices = @transform_1, window_bounds = array<i64: 1, 4, 256>}, {transform_indices = @transform_2, window_bounds = array<i64: 1, 1, 256>}]} {
    %c0_i32 = arith.constant 0 : i32
    %0 = arith.cmpi eq, %arg1, %c0_i32 : i32
    %1 = arith.extui %0 : i1 to i32
    %c0_i32_0 = arith.constant 0 : i32
    %2 = arith.cmpi ne, %1, %c0_i32_0 : i32
    scf.if %2 {
      %cst_16 = arith.constant 0.000000e+00 : f32
      %21 = vector.broadcast %cst_16 : f32 to vector<1x512xf32>
      %c0_17 = arith.constant 0 : index
      %c0_18 = arith.constant 0 : index
      %c0_19 = arith.constant 0 : index
      %22 = vector.load %arg5[%c0_17, %c0_18, %c0_19] : memref<2x1x512xf32, #tpu.memory_space<vmem>>, vector<1x1x512xf32>
      %23 = vector.shape_cast %22 : vector<1x1x512xf32> to vector<1x512xf32>
      %24 = vector.shape_cast %21 : vector<1x512xf32> to vector<1x1x512xf32>
      tpu.vector_store %arg5[%c0_17, %c0_18, %c0_19], %24 {strides = array<i32>} : memref<2x1x512xf32, #tpu.memory_space<vmem>>, vector<1x1x512xf32>,
      %cst_20 = arith.constant 0.000000e+00 : f32
      %25 = vector.broadcast %cst_20 : f32 to vector<1x128xf32>
      %c1_21 = arith.constant 1 : index
      %c0_22 = arith.constant 0 : index
      %c0_23 = arith.constant 0 : index
      %26 = vector.load %arg5[%c1_21, %c0_22, %c0_23] : memref<2x1x512xf32, #tpu.memory_space<vmem>>, vector<1x1x128xf32>
      %27 = vector.shape_cast %26 : vector<1x1x128xf32> to vector<1x128xf32>
      %28 = vector.shape_cast %25 : vector<1x128xf32> to vector<1x1x128xf32>
      tpu.vector_store %arg5[%c1_21, %c0_22, %c0_23], %28 {strides = array<i32>} : memref<2x1x512xf32, #tpu.memory_space<vmem>>, vector<1x1x128xf32>,
      %cst_24 = arith.constant 0.000000e+00 : f32
      %29 = vector.broadcast %cst_24 : f32 to vector<1x128xf32>
      %c1_25 = arith.constant 1 : index
      %c0_26 = arith.constant 0 : index
      %c384 = arith.constant 384 : index
      %30 = vector.load %arg5[%c1_25, %c0_26, %c384] : memref<2x1x512xf32, #tpu.memory_space<vmem>>, vector<1x1x128xf32>
      %31 = vector.shape_cast %30 : vector<1x1x128xf32> to vector<1x128xf32>
      %32 = vector.shape_cast %29 : vector<1x128xf32> to vector<1x1x128xf32>
      tpu.vector_store %arg5[%c1_25, %c0_26, %c384], %32 {strides = array<i32>} : memref<2x1x512xf32, #tpu.memory_space<vmem>>, vector<1x1x128xf32>,
      %cst_27 = arith.constant 0xFF800000 : f32
      %33 = vector.broadcast %cst_27 : f32 to vector<1x256xf32>
      %c1_28 = arith.constant 1 : index
      %c0_29 = arith.constant 0 : index
      %c128_30 = arith.constant 128 : index
      %34 = vector.load %arg5[%c1_28, %c0_29, %c128_30] : memref<2x1x512xf32, #tpu.memory_space<vmem>>, vector<1x1x256xf32>
      %35 = vector.shape_cast %34 : vector<1x1x256xf32> to vector<1x256xf32>
      %36 = vector.shape_cast %33 : vector<1x256xf32> to vector<1x1x256xf32>
      tpu.vector_store %arg5[%c1_28, %c0_29, %c128_30], %36 {strides = array<i32>} : memref<2x1x512xf32, #tpu.memory_space<vmem>>, vector<1x1x256xf32>,
    } else {
    }
    %c0 = arith.constant 0 : index
    %c0_1 = arith.constant 0 : index
    %c0_2 = arith.constant 0 : index
    %3 = vector.load %arg3[%c0, %c0_1, %c0_2] : memref<1x4x256xf32, #tpu.memory_space<vmem>>, vector<1x4x256xf32>
    %c0_3 = arith.constant 0 : index
    %c0_4 = arith.constant 0 : index
    %c128 = arith.constant 128 : index
    %4 = vector.load %arg5[%c0_3, %c0_4, %c128] : memref<2x1x512xf32, #tpu.memory_space<vmem>>, vector<1x1x256xf32>
    %5 = vector.shape_cast %4 : vector<1x1x256xf32> to vector<1x256xf32>
    %cst = arith.constant dense<0.000000e+00> : vector<1x256xf32>
    %6 = vector.multi_reduction <add>, %3, %cst [1] : vector<1x4x256xf32> to vector<1x256xf32>
    %7 = arith.addf %5, %6 : vector<1x256xf32>
    %c0_5 = arith.constant 0 : index
    %c0_6 = arith.constant 0 : index
    %c128_7 = arith.constant 128 : index
    %8 = vector.load %arg5[%c0_5, %c0_6, %c128_7] : memref<2x1x512xf32, #tpu.memory_space<vmem>>, vector<1x1x256xf32>
    %9 = vector.shape_cast %8 : vector<1x1x256xf32> to vector<1x256xf32>
    %10 = vector.shape_cast %7 : vector<1x256xf32> to vector<1x1x256xf32>
    tpu.vector_store %arg5[%c0_5, %c0_6, %c128_7], %10 {strides = array<i32>} : memref<2x1x512xf32, #tpu.memory_space<vmem>>, vector<1x1x256xf32>,
    %c1 = arith.constant 1 : index
    %c0_8 = arith.constant 0 : index
    %c128_9 = arith.constant 128 : index
    %11 = vector.load %arg5[%c1, %c0_8, %c128_9] : memref<2x1x512xf32, #tpu.memory_space<vmem>>, vector<1x1x256xf32>
    %12 = vector.shape_cast %11 : vector<1x1x256xf32> to vector<1x256xf32>
    %cst_10 = arith.constant dense<0xFF800000> : vector<1x256xf32>
    %13 = vector.multi_reduction <maximumf>, %3, %cst_10 [1] : vector<1x4x256xf32> to vector<1x256xf32>
    %14 = arith.maximumf %12, %13 : vector<1x256xf32>
    %c1_11 = arith.constant 1 : index
    %c0_12 = arith.constant 0 : index
    %c128_13 = arith.constant 128 : index
    %15 = vector.load %arg5[%c1_11, %c0_12, %c128_13] : memref<2x1x512xf32, #tpu.memory_space<vmem>>, vector<1x1x256xf32>
    %16 = vector.shape_cast %15 : vector<1x1x256xf32> to vector<1x256xf32>
    %17 = vector.shape_cast %14 : vector<1x256xf32> to vector<1x1x256xf32>
    tpu.vector_store %arg5[%c1_11, %c0_12, %c128_13], %17 {strides = array<i32>} : memref<2x1x512xf32, #tpu.memory_space<vmem>>, vector<1x1x256xf32>,
    %c0_i32_14 = arith.constant 0 : i32
    %18 = arith.cmpi eq, %arg1, %c0_i32_14 : i32
    %19 = arith.extui %18 : i1 to i32
    %c0_i32_15 = arith.constant 0 : i32
    %20 = arith.cmpi ne, %19, %c0_i32_15 : i32
    scf.if %20 {
      %c0_16 = arith.constant 0 : index
      %c0_17 = arith.constant 0 : index
      %c77 = arith.constant 77 : index
      %21 = vector.load %arg5[%c0_16, %c0_17, %c77] : memref<2x1x512xf32, #tpu.memory_space<vmem>>, vector<1x1x358xf32>
      %22 = vector.shape_cast %21 : vector<1x1x358xf32> to vector<1x358xf32>
      %c1_18 = arith.constant 1 : index
      %c0_19 = arith.constant 0 : index
      %c77_20 = arith.constant 77 : index
      %23 = vector.load %arg5[%c1_18, %c0_19, %c77_20] : memref<2x1x512xf32, #tpu.memory_space<vmem>>, vector<1x1x358xf32>
      %24 = vector.shape_cast %23 : vector<1x1x358xf32> to vector<1x358xf32>
      %25 = tpu.iota {dimensions = array<i32: 1>} : vector<1x256xi32>
      %c0_i32_21 = arith.constant 0 : i32
      %26 = vector.broadcast %c0_i32_21 : i32 to vector<1x256xi32>
      %27 = arith.addi %26, %25 : vector<1x256xi32>
      %c15_i32 = arith.constant 15 : i32
      %28 = vector.broadcast %c15_i32 : i32 to vector<1x256xi32>
      %29 = arith.andi %27, %28 : vector<1x256xi32>
      %cst_22 = arith.constant 0.000000e+00 : f32
      %30 = vector.broadcast %cst_22 : f32 to vector<1x256xf32>
      %cst_23 = arith.constant 0.000000e+00 : f32
      %31 = vector.broadcast %cst_23 : f32 to vector<1x256xf32>
      %cst_24 = arith.constant 0.000000e+00 : f32
      %32 = vector.broadcast %cst_24 : f32 to vector<1x256xf32>
      %c0_25 = arith.constant 0 : index
      %33 = memref.load %arg2[%c0_25] : memref<98xf32, #tpu.memory_space<smem>>
      %34 = vector.extract_strided_slice %22 {offsets = [0, 0], sizes = [1, 256], strides = [1, 1]} : vector<1x358xf32> to vector<1x256xf32>
      %35 = vector.broadcast %33 : f32 to vector<1x256xf32>
      %36 = arith.mulf %35, %34 : vector<1x256xf32>
      %37 = arith.addf %31, %36 : vector<1x256xf32>
      %c49 = arith.constant 49 : index
      %38 = memref.load %arg2[%c49] : memref<98xf32, #tpu.memory_space<smem>>
      %39 = vector.extract_strided_slice %24 {offsets = [0, 0], sizes = [1, 256], strides = [1, 1]} : vector<1x358xf32> to vector<1x256xf32>
      %40 = vector.broadcast %38 : f32 to vector<1x256xf32>
      %41 = arith.mulf %40, %39 : vector<1x256xf32>
      %42 = arith.addf %32, %41 : vector<1x256xf32>
      %c7 = arith.constant 7 : index
      %43 = memref.load %arg2[%c7] : memref<98xf32, #tpu.memory_space<smem>>
      %44 = vector.extract_strided_slice %22 {offsets = [0, 16], sizes = [1, 256], strides = [1, 1]} : vector<1x358xf32> to vector<1x256xf32>
      %45 = vector.broadcast %43 : f32 to vector<1x256xf32>
      %46 = arith.mulf %45, %44 : vector<1x256xf32>
      %47 = arith.addf %37, %46 : vector<1x256xf32>
      %c56 = arith.constant 56 : index
      %48 = memref.load %arg2[%c56] : memref<98xf32, #tpu.memory_space<smem>>
      %49 = vector.extract_strided_slice %24 {offsets = [0, 16], sizes = [1, 256], strides = [1, 1]} : vector<1x358xf32> to vector<1x256xf32>
      %50 = vector.broadcast %48 : f32 to vector<1x256xf32>
      %51 = arith.mulf %50, %49 : vector<1x256xf32>
      %52 = arith.addf %42, %51 : vector<1x256xf32>
      %c14 = arith.constant 14 : index
      %53 = memref.load %arg2[%c14] : memref<98xf32, #tpu.memory_space<smem>>
      %54 = vector.extract_strided_slice %22 {offsets = [0, 32], sizes = [1, 256], strides = [1, 1]} : vector<1x358xf32> to vector<1x256xf32>
      %55 = vector.broadcast %53 : f32 to vector<1x256xf32>
      %56 = arith.mulf %55, %54 : vector<1x256xf32>
      %57 = arith.addf %47, %56 : vector<1x256xf32>
      %c63 = arith.constant 63 : index
      %58 = memref.load %arg2[%c63] : memref<98xf32, #tpu.memory_space<smem>>
      %59 = vector.extract_strided_slice %24 {offsets = [0, 32], sizes = [1, 256], strides = [1, 1]} : vector<1x358xf32> to vector<1x256xf32>
      %60 = vector.broadcast %58 : f32 to vector<1x256xf32>
      %61 = arith.mulf %60, %59 : vector<1x256xf32>
      %62 = arith.addf %52, %61 : vector<1x256xf32>
      %c21 = arith.constant 21 : index
      %63 = memref.load %arg2[%c21] : memref<98xf32, #tpu.memory_space<smem>>
      %64 = vector.extract_strided_slice %22 {offsets = [0, 48], sizes = [1, 256], strides = [1, 1]} : vector<1x358xf32> to vector<1x256xf32>
      %65 = vector.broadcast %63 : f32 to vector<1x256xf32>
      %66 = arith.mulf %65, %64 : vector<1x256xf32>
      %67 = arith.addf %57, %66 : vector<1x256xf32>
      %c70 = arith.constant 70 : index
      %68 = memref.load %arg2[%c70] : memref<98xf32, #tpu.memory_space<smem>>
      %69 = vector.extract_strided_slice %24 {offsets = [0, 48], sizes = [1, 256], strides = [1, 1]} : vector<1x358xf32> to vector<1x256xf32>
      %70 = vector.broadcast %68 : f32 to vector<1x256xf32>
      %71 = arith.mulf %70, %69 : vector<1x256xf32>
      %72 = arith.addf %62, %71 : vector<1x256xf32>
      %c28 = arith.constant 28 : index
      %73 = memref.load %arg2[%c28] : memref<98xf32, #tpu.memory_space<smem>>
      %74 = vector.extract_strided_slice %22 {offsets = [0, 64], sizes = [1, 256], strides = [1, 1]} : vector<1x358xf32> to vector<1x256xf32>
      %75 = vector.broadcast %73 : f32 to vector<1x256xf32>
      %76 = arith.mulf %75, %74 : vector<1x256xf32>
      %77 = arith.addf %67, %76 : vector<1x256xf32>
      %c77_26 = arith.constant 77 : index
      %78 = memref.load %arg2[%c77_26] : memref<98xf32, #tpu.memory_space<smem>>
      %79 = vector.extract_strided_slice %24 {offsets = [0, 64], sizes = [1, 256], strides = [1, 1]} : vector<1x358xf32> to vector<1x256xf32>
      %80 = vector.broadcast %78 : f32 to vector<1x256xf32>
      %81 = arith.mulf %80, %79 : vector<1x256xf32>
      %82 = arith.addf %72, %81 : vector<1x256xf32>
      %c35 = arith.constant 35 : index
      %83 = memref.load %arg2[%c35] : memref<98xf32, #tpu.memory_space<smem>>
      %84 = vector.extract_strided_slice %22 {offsets = [0, 80], sizes = [1, 256], strides = [1, 1]} : vector<1x358xf32> to vector<1x256xf32>
      %85 = vector.broadcast %83 : f32 to vector<1x256xf32>
      %86 = arith.mulf %85, %84 : vector<1x256xf32>
      %87 = arith.addf %77, %86 : vector<1x256xf32>
      %c84 = arith.constant 84 : index
      %88 = memref.load %arg2[%c84] : memref<98xf32, #tpu.memory_space<smem>>
      %89 = vector.extract_strided_slice %24 {offsets = [0, 80], sizes = [1, 256], strides = [1, 1]} : vector<1x358xf32> to vector<1x256xf32>
      %90 = vector.broadcast %88 : f32 to vector<1x256xf32>
      %91 = arith.mulf %90, %89 : vector<1x256xf32>
      %92 = arith.addf %82, %91 : vector<1x256xf32>
      %c42 = arith.constant 42 : index
      %93 = memref.load %arg2[%c42] : memref<98xf32, #tpu.memory_space<smem>>
      %94 = vector.extract_strided_slice %22 {offsets = [0, 96], sizes = [1, 256], strides = [1, 1]} : vector<1x358xf32> to vector<1x256xf32>
      %95 = vector.broadcast %93 : f32 to vector<1x256xf32>
      %96 = arith.mulf %95, %94 : vector<1x256xf32>
      %97 = arith.addf %87, %96 : vector<1x256xf32>
      %c91 = arith.constant 91 : index
      %98 = memref.load %arg2[%c91] : memref<98xf32, #tpu.memory_space<smem>>
      %99 = vector.extract_strided_slice %24 {offsets = [0, 96], sizes = [1, 256], strides = [1, 1]} : vector<1x358xf32> to vector<1x256xf32>
      %100 = vector.broadcast %98 : f32 to vector<1x256xf32>
      %101 = arith.mulf %100, %99 : vector<1x256xf32>
      %102 = arith.addf %92, %101 : vector<1x256xf32>
      %103 = arith.addf %97, %102 : vector<1x256xf32>
      %c3_i32 = arith.constant 3 : i32
      %104 = vector.broadcast %c3_i32 : i32 to vector<1x256xi32>
      %105 = arith.cmpi sge, %29, %104 : vector<1x256xi32>
      %c19_i32 = arith.constant 19 : i32
      %106 = vector.broadcast %c19_i32 : i32 to vector<1x256xi32>
      %107 = arith.cmpi slt, %29, %106 : vector<1x256xi32>
      %108 = arith.andi %105, %107 : vector<1x256xi1>
      %109 = arith.extui %108 : vector<1x256xi1> to vector<1x256xi32>
      %110 = arith.sitofp %109 : vector<1x256xi32> to vector<1x256xf32>
      %111 = arith.mulf %103, %110 : vector<1x256xf32>
      %112 = arith.addf %30, %111 : vector<1x256xf32>
      %cst_27 = arith.constant 0.000000e+00 : f32
      %113 = vector.broadcast %cst_27 : f32 to vector<1x256xf32>
      %cst_28 = arith.constant 0.000000e+00 : f32
      %114 = vector.broadcast %cst_28 : f32 to vector<1x256xf32>
      %c1_29 = arith.constant 1 : index
      %115 = memref.load %arg2[%c1_29] : memref<98xf32, #tpu.memory_space<smem>>
      %116 = vector.extract_strided_slice %22 {offsets = [0, 1], sizes = [1, 256], strides = [1, 1]} : vector<1x358xf32> to vector<1x256xf32>
      %117 = vector.broadcast %115 : f32 to vector<1x256xf32>
      %118 = arith.mulf %117, %116 : vector<1x256xf32>
      %119 = arith.addf %113, %118 : vector<1x256xf32>
      %c50 = arith.constant 50 : index
      %120 = memref.load %arg2[%c50] : memref<98xf32, #tpu.memory_space<smem>>
      %121 = vector.extract_strided_slice %24 {offsets = [0, 1], sizes = [1, 256], strides = [1, 1]} : vector<1x358xf32> to vector<1x256xf32>
      %122 = vector.broadcast %120 : f32 to vector<1x256xf32>
      %123 = arith.mulf %122, %121 : vector<1x256xf32>
      %124 = arith.addf %114, %123 : vector<1x256xf32>
      %c8 = arith.constant 8 : index
      %125 = memref.load %arg2[%c8] : memref<98xf32, #tpu.memory_space<smem>>
      %126 = vector.extract_strided_slice %22 {offsets = [0, 17], sizes = [1, 256], strides = [1, 1]} : vector<1x358xf32> to vector<1x256xf32>
      %127 = vector.broadcast %125 : f32 to vector<1x256xf32>
      %128 = arith.mulf %127, %126 : vector<1x256xf32>
      %129 = arith.addf %119, %128 : vector<1x256xf32>
      %c57 = arith.constant 57 : index
      %130 = memref.load %arg2[%c57] : memref<98xf32, #tpu.memory_space<smem>>
      %131 = vector.extract_strided_slice %24 {offsets = [0, 17], sizes = [1, 256], strides = [1, 1]} : vector<1x358xf32> to vector<1x256xf32>
      %132 = vector.broadcast %130 : f32 to vector<1x256xf32>
      %133 = arith.mulf %132, %131 : vector<1x256xf32>
      %134 = arith.addf %124, %133 : vector<1x256xf32>
      %c15 = arith.constant 15 : index
      %135 = memref.load %arg2[%c15] : memref<98xf32, #tpu.memory_space<smem>>
      %136 = vector.extract_strided_slice %22 {offsets = [0, 33], sizes = [1, 256], strides = [1, 1]} : vector<1x358xf32> to vector<1x256xf32>
      %137 = vector.broadcast %135 : f32 to vector<1x256xf32>
      %138 = arith.mulf %137, %136 : vector<1x256xf32>
      %139 = arith.addf %129, %138 : vector<1x256xf32>
      %c64 = arith.constant 64 : index
      %140 = memref.load %arg2[%c64] : memref<98xf32, #tpu.memory_space<smem>>
      %141 = vector.extract_strided_slice %24 {offsets = [0, 33], sizes = [1, 256], strides = [1, 1]} : vector<1x358xf32> to vector<1x256xf32>
      %142 = vector.broadcast %140 : f32 to vector<1x256xf32>
      %143 = arith.mulf %142, %141 : vector<1x256xf32>
      %144 = arith.addf %134, %143 : vector<1x256xf32>
      %c22 = arith.constant 22 : index
      %145 = memref.load %arg2[%c22] : memref<98xf32, #tpu.memory_space<smem>>
      %146 = vector.extract_strided_slice %22 {offsets = [0, 49], sizes = [1, 256], strides = [1, 1]} : vector<1x358xf32> to vector<1x256xf32>
      %147 = vector.broadcast %145 : f32 to vector<1x256xf32>
      %148 = arith.mulf %147, %146 : vector<1x256xf32>
      %149 = arith.addf %139, %148 : vector<1x256xf32>
      %c71 = arith.constant 71 : index
      %150 = memref.load %arg2[%c71] : memref<98xf32, #tpu.memory_space<smem>>
      %151 = vector.extract_strided_slice %24 {offsets = [0, 49], sizes = [1, 256], strides = [1, 1]} : vector<1x358xf32> to vector<1x256xf32>
      %152 = vector.broadcast %150 : f32 to vector<1x256xf32>
      %153 = arith.mulf %152, %151 : vector<1x256xf32>
      %154 = arith.addf %144, %153 : vector<1x256xf32>
      %c29 = arith.constant 29 : index
      %155 = memref.load %arg2[%c29] : memref<98xf32, #tpu.memory_space<smem>>
      %156 = vector.extract_strided_slice %22 {offsets = [0, 65], sizes = [1, 256], strides = [1, 1]} : vector<1x358xf32> to vector<1x256xf32>
      %157 = vector.broadcast %155 : f32 to vector<1x256xf32>
      %158 = arith.mulf %157, %156 : vector<1x256xf32>
      %159 = arith.addf %149, %158 : vector<1x256xf32>
      %c78 = arith.constant 78 : index
      %160 = memref.load %arg2[%c78] : memref<98xf32, #tpu.memory_space<smem>>
      %161 = vector.extract_strided_slice %24 {offsets = [0, 65], sizes = [1, 256], strides = [1, 1]} : vector<1x358xf32> to vector<1x256xf32>
      %162 = vector.broadcast %160 : f32 to vector<1x256xf32>
      %163 = arith.mulf %162, %161 : vector<1x256xf32>
      %164 = arith.addf %154, %163 : vector<1x256xf32>
      %c36 = arith.constant 36 : index
      %165 = memref.load %arg2[%c36] : memref<98xf32, #tpu.memory_space<smem>>
      %166 = vector.extract_strided_slice %22 {offsets = [0, 81], sizes = [1, 256], strides = [1, 1]} : vector<1x358xf32> to vector<1x256xf32>
      %167 = vector.broadcast %165 : f32 to vector<1x256xf32>
      %168 = arith.mulf %167, %166 : vector<1x256xf32>
      %169 = arith.addf %159, %168 : vector<1x256xf32>
      %c85 = arith.constant 85 : index
      %170 = memref.load %arg2[%c85] : memref<98xf32, #tpu.memory_space<smem>>
      %171 = vector.extract_strided_slice %24 {offsets = [0, 81], sizes = [1, 256], strides = [1, 1]} : vector<1x358xf32> to vector<1x256xf32>
      %172 = vector.broadcast %170 : f32 to vector<1x256xf32>
      %173 = arith.mulf %172, %171 : vector<1x256xf32>
      %174 = arith.addf %164, %173 : vector<1x256xf32>
      %c43 = arith.constant 43 : index
      %175 = memref.load %arg2[%c43] : memref<98xf32, #tpu.memory_space<smem>>
      %176 = vector.extract_strided_slice %22 {offsets = [0, 97], sizes = [1, 256], strides = [1, 1]} : vector<1x358xf32> to vector<1x256xf32>
      %177 = vector.broadcast %175 : f32 to vector<1x256xf32>
      %178 = arith.mulf %177, %176 : vector<1x256xf32>
      %179 = arith.addf %169, %178 : vector<1x256xf32>
      %c92 = arith.constant 92 : index
      %180 = memref.load %arg2[%c92] : memref<98xf32, #tpu.memory_space<smem>>
      %181 = vector.extract_strided_slice %24 {offsets = [0, 97], sizes = [1, 256], strides = [1, 1]} : vector<1x358xf32> to vector<1x256xf32>
      %182 = vector.broadcast %180 : f32 to vector<1x256xf32>
      %183 = arith.mulf %182, %181 : vector<1x256xf32>
      %184 = arith.addf %174, %183 : vector<1x256xf32>
      %185 = arith.addf %179, %184 : vector<1x256xf32>
      %c2_i32 = arith.constant 2 : i32
      %186 = vector.broadcast %c2_i32 : i32 to vector<1x256xi32>
      %187 = arith.cmpi sge, %29, %186 : vector<1x256xi32>
      %c18_i32 = arith.constant 18 : i32
      %188 = vector.broadcast %c18_i32 : i32 to vector<1x256xi32>
      %189 = arith.cmpi slt, %29, %188 : vector<1x256xi32>
      %190 = arith.andi %187, %189 : vector<1x256xi1>
      %191 = arith.extui %190 : vector<1x256xi1> to vector<1x256xi32>
      %192 = arith.sitofp %191 : vector<1x256xi32> to vector<1x256xf32>
      %193 = arith.mulf %185, %192 : vector<1x256xf32>
      %194 = arith.addf %112, %193 : vector<1x256xf32>
      %cst_30 = arith.constant 0.000000e+00 : f32
      %195 = vector.broadcast %cst_30 : f32 to vector<1x256xf32>
      %cst_31 = arith.constant 0.000000e+00 : f32
      %196 = vector.broadcast %cst_31 : f32 to vector<1x256xf32>
      %c2 = arith.constant 2 : index
      %197 = memref.load %arg2[%c2] : memref<98xf32, #tpu.memory_space<smem>>
      %198 = vector.extract_strided_slice %22 {offsets = [0, 2], sizes = [1, 256], strides = [1, 1]} : vector<1x358xf32> to vector<1x256xf32>
      %199 = vector.broadcast %197 : f32 to vector<1x256xf32>
      %200 = arith.mulf %199, %198 : vector<1x256xf32>
      %201 = arith.addf %195, %200 : vector<1x256xf32>
      %c51 = arith.constant 51 : index
      %202 = memref.load %arg2[%c51] : memref<98xf32, #tpu.memory_space<smem>>
      %203 = vector.extract_strided_slice %24 {offsets = [0, 2], sizes = [1, 256], strides = [1, 1]} : vector<1x358xf32> to vector<1x256xf32>
      %204 = vector.broadcast %202 : f32 to vector<1x256xf32>
      %205 = arith.mulf %204, %203 : vector<1x256xf32>
      %206 = arith.addf %196, %205 : vector<1x256xf32>
      %c9 = arith.constant 9 : index
      %207 = memref.load %arg2[%c9] : memref<98xf32, #tpu.memory_space<smem>>
      %208 = vector.extract_strided_slice %22 {offsets = [0, 18], sizes = [1, 256], strides = [1, 1]} : vector<1x358xf32> to vector<1x256xf32>
      %209 = vector.broadcast %207 : f32 to vector<1x256xf32>
      %210 = arith.mulf %209, %208 : vector<1x256xf32>
      %211 = arith.addf %201, %210 : vector<1x256xf32>
      %c58 = arith.constant 58 : index
      %212 = memref.load %arg2[%c58] : memref<98xf32, #tpu.memory_space<smem>>
      %213 = vector.extract_strided_slice %24 {offsets = [0, 18], sizes = [1, 256], strides = [1, 1]} : vector<1x358xf32> to vector<1x256xf32>
      %214 = vector.broadcast %212 : f32 to vector<1x256xf32>
      %215 = arith.mulf %214, %213 : vector<1x256xf32>
      %216 = arith.addf %206, %215 : vector<1x256xf32>
      %c16 = arith.constant 16 : index
      %217 = memref.load %arg2[%c16] : memref<98xf32, #tpu.memory_space<smem>>
      %218 = vector.extract_strided_slice %22 {offsets = [0, 34], sizes = [1, 256], strides = [1, 1]} : vector<1x358xf32> to vector<1x256xf32>
      %219 = vector.broadcast %217 : f32 to vector<1x256xf32>
      %220 = arith.mulf %219, %218 : vector<1x256xf32>
      %221 = arith.addf %211, %220 : vector<1x256xf32>
      %c65 = arith.constant 65 : index
      %222 = memref.load %arg2[%c65] : memref<98xf32, #tpu.memory_space<smem>>
      %223 = vector.extract_strided_slice %24 {offsets = [0, 34], sizes = [1, 256], strides = [1, 1]} : vector<1x358xf32> to vector<1x256xf32>
      %224 = vector.broadcast %222 : f32 to vector<1x256xf32>
      %225 = arith.mulf %224, %223 : vector<1x256xf32>
      %226 = arith.addf %216, %225 : vector<1x256xf32>
      %c23 = arith.constant 23 : index
      %227 = memref.load %arg2[%c23] : memref<98xf32, #tpu.memory_space<smem>>
      %228 = vector.extract_strided_slice %22 {offsets = [0, 50], sizes = [1, 256], strides = [1, 1]} : vector<1x358xf32> to vector<1x256xf32>
      %229 = vector.broadcast %227 : f32 to vector<1x256xf32>
      %230 = arith.mulf %229, %228 : vector<1x256xf32>
      %231 = arith.addf %221, %230 : vector<1x256xf32>
      %c72 = arith.constant 72 : index
      %232 = memref.load %arg2[%c72] : memref<98xf32, #tpu.memory_space<smem>>
      %233 = vector.extract_strided_slice %24 {offsets = [0, 50], sizes = [1, 256], strides = [1, 1]} : vector<1x358xf32> to vector<1x256xf32>
      %234 = vector.broadcast %232 : f32 to vector<1x256xf32>
      %235 = arith.mulf %234, %233 : vector<1x256xf32>
      %236 = arith.addf %226, %235 : vector<1x256xf32>
      %c30 = arith.constant 30 : index
      %237 = memref.load %arg2[%c30] : memref<98xf32, #tpu.memory_space<smem>>
      %238 = vector.extract_strided_slice %22 {offsets = [0, 66], sizes = [1, 256], strides = [1, 1]} : vector<1x358xf32> to vector<1x256xf32>
      %239 = vector.broadcast %237 : f32 to vector<1x256xf32>
      %240 = arith.mulf %239, %238 : vector<1x256xf32>
      %241 = arith.addf %231, %240 : vector<1x256xf32>
      %c79 = arith.constant 79 : index
      %242 = memref.load %arg2[%c79] : memref<98xf32, #tpu.memory_space<smem>>
      %243 = vector.extract_strided_slice %24 {offsets = [0, 66], sizes = [1, 256], strides = [1, 1]} : vector<1x358xf32> to vector<1x256xf32>
      %244 = vector.broadcast %242 : f32 to vector<1x256xf32>
      %245 = arith.mulf %244, %243 : vector<1x256xf32>
      %246 = arith.addf %236, %245 : vector<1x256xf32>
      %c37 = arith.constant 37 : index
      %247 = memref.load %arg2[%c37] : memref<98xf32, #tpu.memory_space<smem>>
      %248 = vector.extract_strided_slice %22 {offsets = [0, 82], sizes = [1, 256], strides = [1, 1]} : vector<1x358xf32> to vector<1x256xf32>
      %249 = vector.broadcast %247 : f32 to vector<1x256xf32>
      %250 = arith.mulf %249, %248 : vector<1x256xf32>
      %251 = arith.addf %241, %250 : vector<1x256xf32>
      %c86 = arith.constant 86 : index
      %252 = memref.load %arg2[%c86] : memref<98xf32, #tpu.memory_space<smem>>
      %253 = vector.extract_strided_slice %24 {offsets = [0, 82], sizes = [1, 256], strides = [1, 1]} : vector<1x358xf32> to vector<1x256xf32>
      %254 = vector.broadcast %252 : f32 to vector<1x256xf32>
      %255 = arith.mulf %254, %253 : vector<1x256xf32>
      %256 = arith.addf %246, %255 : vector<1x256xf32>
      %c44 = arith.constant 44 : index
      %257 = memref.load %arg2[%c44] : memref<98xf32, #tpu.memory_space<smem>>
      %258 = vector.extract_strided_slice %22 {offsets = [0, 98], sizes = [1, 256], strides = [1, 1]} : vector<1x358xf32> to vector<1x256xf32>
      %259 = vector.broadcast %257 : f32 to vector<1x256xf32>
      %260 = arith.mulf %259, %258 : vector<1x256xf32>
      %261 = arith.addf %251, %260 : vector<1x256xf32>
      %c93 = arith.constant 93 : index
      %262 = memref.load %arg2[%c93] : memref<98xf32, #tpu.memory_space<smem>>
      %263 = vector.extract_strided_slice %24 {offsets = [0, 98], sizes = [1, 256], strides = [1, 1]} : vector<1x358xf32> to vector<1x256xf32>
      %264 = vector.broadcast %262 : f32 to vector<1x256xf32>
      %265 = arith.mulf %264, %263 : vector<1x256xf32>
      %266 = arith.addf %256, %265 : vector<1x256xf32>
      %267 = arith.addf %261, %266 : vector<1x256xf32>
      %c1_i32 = arith.constant 1 : i32
      %268 = vector.broadcast %c1_i32 : i32 to vector<1x256xi32>
      %269 = arith.cmpi sge, %29, %268 : vector<1x256xi32>
      %c17_i32 = arith.constant 17 : i32
      %270 = vector.broadcast %c17_i32 : i32 to vector<1x256xi32>
      %271 = arith.cmpi slt, %29, %270 : vector<1x256xi32>
      %272 = arith.andi %269, %271 : vector<1x256xi1>
      %273 = arith.extui %272 : vector<1x256xi1> to vector<1x256xi32>
      %274 = arith.sitofp %273 : vector<1x256xi32> to vector<1x256xf32>
      %275 = arith.mulf %267, %274 : vector<1x256xf32>
      %276 = arith.addf %194, %275 : vector<1x256xf32>
      %cst_32 = arith.constant 0.000000e+00 : f32
      %277 = vector.broadcast %cst_32 : f32 to vector<1x256xf32>
      %cst_33 = arith.constant 0.000000e+00 : f32
      %278 = vector.broadcast %cst_33 : f32 to vector<1x256xf32>
      %c3 = arith.constant 3 : index
      %279 = memref.load %arg2[%c3] : memref<98xf32, #tpu.memory_space<smem>>
      %280 = vector.extract_strided_slice %22 {offsets = [0, 3], sizes = [1, 256], strides = [1, 1]} : vector<1x358xf32> to vector<1x256xf32>
      %281 = vector.broadcast %279 : f32 to vector<1x256xf32>
      %282 = arith.mulf %281, %280 : vector<1x256xf32>
      %283 = arith.addf %277, %282 : vector<1x256xf32>
      %c52 = arith.constant 52 : index
      %284 = memref.load %arg2[%c52] : memref<98xf32, #tpu.memory_space<smem>>
      %285 = vector.extract_strided_slice %24 {offsets = [0, 3], sizes = [1, 256], strides = [1, 1]} : vector<1x358xf32> to vector<1x256xf32>
      %286 = vector.broadcast %284 : f32 to vector<1x256xf32>
      %287 = arith.mulf %286, %285 : vector<1x256xf32>
      %288 = arith.addf %278, %287 : vector<1x256xf32>
      %c10 = arith.constant 10 : index
      %289 = memref.load %arg2[%c10] : memref<98xf32, #tpu.memory_space<smem>>
      %290 = vector.extract_strided_slice %22 {offsets = [0, 19], sizes = [1, 256], strides = [1, 1]} : vector<1x358xf32> to vector<1x256xf32>
      %291 = vector.broadcast %289 : f32 to vector<1x256xf32>
      %292 = arith.mulf %291, %290 : vector<1x256xf32>
      %293 = arith.addf %283, %292 : vector<1x256xf32>
      %c59 = arith.constant 59 : index
      %294 = memref.load %arg2[%c59] : memref<98xf32, #tpu.memory_space<smem>>
      %295 = vector.extract_strided_slice %24 {offsets = [0, 19], sizes = [1, 256], strides = [1, 1]} : vector<1x358xf32> to vector<1x256xf32>
      %296 = vector.broadcast %294 : f32 to vector<1x256xf32>
      %297 = arith.mulf %296, %295 : vector<1x256xf32>
      %298 = arith.addf %288, %297 : vector<1x256xf32>
      %c17 = arith.constant 17 : index
      %299 = memref.load %arg2[%c17] : memref<98xf32, #tpu.memory_space<smem>>
      %300 = vector.extract_strided_slice %22 {offsets = [0, 35], sizes = [1, 256], strides = [1, 1]} : vector<1x358xf32> to vector<1x256xf32>
      %301 = vector.broadcast %299 : f32 to vector<1x256xf32>
      %302 = arith.mulf %301, %300 : vector<1x256xf32>
      %303 = arith.addf %293, %302 : vector<1x256xf32>
      %c66 = arith.constant 66 : index
      %304 = memref.load %arg2[%c66] : memref<98xf32, #tpu.memory_space<smem>>
      %305 = vector.extract_strided_slice %24 {offsets = [0, 35], sizes = [1, 256], strides = [1, 1]} : vector<1x358xf32> to vector<1x256xf32>
      %306 = vector.broadcast %304 : f32 to vector<1x256xf32>
      %307 = arith.mulf %306, %305 : vector<1x256xf32>
      %308 = arith.addf %298, %307 : vector<1x256xf32>
      %c24 = arith.constant 24 : index
      %309 = memref.load %arg2[%c24] : memref<98xf32, #tpu.memory_space<smem>>
      %310 = vector.extract_strided_slice %22 {offsets = [0, 51], sizes = [1, 256], strides = [1, 1]} : vector<1x358xf32> to vector<1x256xf32>
      %311 = vector.broadcast %309 : f32 to vector<1x256xf32>
      %312 = arith.mulf %311, %310 : vector<1x256xf32>
      %313 = arith.addf %303, %312 : vector<1x256xf32>
      %c73 = arith.constant 73 : index
      %314 = memref.load %arg2[%c73] : memref<98xf32, #tpu.memory_space<smem>>
      %315 = vector.extract_strided_slice %24 {offsets = [0, 51], sizes = [1, 256], strides = [1, 1]} : vector<1x358xf32> to vector<1x256xf32>
      %316 = vector.broadcast %314 : f32 to vector<1x256xf32>
      %317 = arith.mulf %316, %315 : vector<1x256xf32>
      %318 = arith.addf %308, %317 : vector<1x256xf32>
      %c31 = arith.constant 31 : index
      %319 = memref.load %arg2[%c31] : memref<98xf32, #tpu.memory_space<smem>>
      %320 = vector.extract_strided_slice %22 {offsets = [0, 67], sizes = [1, 256], strides = [1, 1]} : vector<1x358xf32> to vector<1x256xf32>
      %321 = vector.broadcast %319 : f32 to vector<1x256xf32>
      %322 = arith.mulf %321, %320 : vector<1x256xf32>
      %323 = arith.addf %313, %322 : vector<1x256xf32>
      %c80 = arith.constant 80 : index
      %324 = memref.load %arg2[%c80] : memref<98xf32, #tpu.memory_space<smem>>
      %325 = vector.extract_strided_slice %24 {offsets = [0, 67], sizes = [1, 256], strides = [1, 1]} : vector<1x358xf32> to vector<1x256xf32>
      %326 = vector.broadcast %324 : f32 to vector<1x256xf32>
      %327 = arith.mulf %326, %325 : vector<1x256xf32>
      %328 = arith.addf %318, %327 : vector<1x256xf32>
      %c38 = arith.constant 38 : index
      %329 = memref.load %arg2[%c38] : memref<98xf32, #tpu.memory_space<smem>>
      %330 = vector.extract_strided_slice %22 {offsets = [0, 83], sizes = [1, 256], strides = [1, 1]} : vector<1x358xf32> to vector<1x256xf32>
      %331 = vector.broadcast %329 : f32 to vector<1x256xf32>
      %332 = arith.mulf %331, %330 : vector<1x256xf32>
      %333 = arith.addf %323, %332 : vector<1x256xf32>
      %c87 = arith.constant 87 : index
      %334 = memref.load %arg2[%c87] : memref<98xf32, #tpu.memory_space<smem>>
      %335 = vector.extract_strided_slice %24 {offsets = [0, 83], sizes = [1, 256], strides = [1, 1]} : vector<1x358xf32> to vector<1x256xf32>
      %336 = vector.broadcast %334 : f32 to vector<1x256xf32>
      %337 = arith.mulf %336, %335 : vector<1x256xf32>
      %338 = arith.addf %328, %337 : vector<1x256xf32>
      %c45 = arith.constant 45 : index
      %339 = memref.load %arg2[%c45] : memref<98xf32, #tpu.memory_space<smem>>
      %340 = vector.extract_strided_slice %22 {offsets = [0, 99], sizes = [1, 256], strides = [1, 1]} : vector<1x358xf32> to vector<1x256xf32>
      %341 = vector.broadcast %339 : f32 to vector<1x256xf32>
      %342 = arith.mulf %341, %340 : vector<1x256xf32>
      %343 = arith.addf %333, %342 : vector<1x256xf32>
      %c94 = arith.constant 94 : index
      %344 = memref.load %arg2[%c94] : memref<98xf32, #tpu.memory_space<smem>>
      %345 = vector.extract_strided_slice %24 {offsets = [0, 99], sizes = [1, 256], strides = [1, 1]} : vector<1x358xf32> to vector<1x256xf32>
      %346 = vector.broadcast %344 : f32 to vector<1x256xf32>
      %347 = arith.mulf %346, %345 : vector<1x256xf32>
      %348 = arith.addf %338, %347 : vector<1x256xf32>
      %349 = arith.addf %343, %348 : vector<1x256xf32>
      %350 = arith.addf %276, %349 : vector<1x256xf32>
      %cst_34 = arith.constant 0.000000e+00 : f32
      %351 = vector.broadcast %cst_34 : f32 to vector<1x256xf32>
      %cst_35 = arith.constant 0.000000e+00 : f32
      %352 = vector.broadcast %cst_35 : f32 to vector<1x256xf32>
      %c4 = arith.constant 4 : index
      %353 = memref.load %arg2[%c4] : memref<98xf32, #tpu.memory_space<smem>>
      %354 = vector.extract_strided_slice %22 {offsets = [0, 4], sizes = [1, 256], strides = [1, 1]} : vector<1x358xf32> to vector<1x256xf32>
      %355 = vector.broadcast %353 : f32 to vector<1x256xf32>
      %356 = arith.mulf %355, %354 : vector<1x256xf32>
      %357 = arith.addf %351, %356 : vector<1x256xf32>
      %c53 = arith.constant 53 : index
      %358 = memref.load %arg2[%c53] : memref<98xf32, #tpu.memory_space<smem>>
      %359 = vector.extract_strided_slice %24 {offsets = [0, 4], sizes = [1, 256], strides = [1, 1]} : vector<1x358xf32> to vector<1x256xf32>
      %360 = vector.broadcast %358 : f32 to vector<1x256xf32>
      %361 = arith.mulf %360, %359 : vector<1x256xf32>
      %362 = arith.addf %352, %361 : vector<1x256xf32>
      %c11 = arith.constant 11 : index
      %363 = memref.load %arg2[%c11] : memref<98xf32, #tpu.memory_space<smem>>
      %364 = vector.extract_strided_slice %22 {offsets = [0, 20], sizes = [1, 256], strides = [1, 1]} : vector<1x358xf32> to vector<1x256xf32>
      %365 = vector.broadcast %363 : f32 to vector<1x256xf32>
      %366 = arith.mulf %365, %364 : vector<1x256xf32>
      %367 = arith.addf %357, %366 : vector<1x256xf32>
      %c60 = arith.constant 60 : index
      %368 = memref.load %arg2[%c60] : memref<98xf32, #tpu.memory_space<smem>>
      %369 = vector.extract_strided_slice %24 {offsets = [0, 20], sizes = [1, 256], strides = [1, 1]} : vector<1x358xf32> to vector<1x256xf32>
      %370 = vector.broadcast %368 : f32 to vector<1x256xf32>
      %371 = arith.mulf %370, %369 : vector<1x256xf32>
      %372 = arith.addf %362, %371 : vector<1x256xf32>
      %c18 = arith.constant 18 : index
      %373 = memref.load %arg2[%c18] : memref<98xf32, #tpu.memory_space<smem>>
      %374 = vector.extract_strided_slice %22 {offsets = [0, 36], sizes = [1, 256], strides = [1, 1]} : vector<1x358xf32> to vector<1x256xf32>
      %375 = vector.broadcast %373 : f32 to vector<1x256xf32>
      %376 = arith.mulf %375, %374 : vector<1x256xf32>
      %377 = arith.addf %367, %376 : vector<1x256xf32>
      %c67 = arith.constant 67 : index
      %378 = memref.load %arg2[%c67] : memref<98xf32, #tpu.memory_space<smem>>
      %379 = vector.extract_strided_slice %24 {offsets = [0, 36], sizes = [1, 256], strides = [1, 1]} : vector<1x358xf32> to vector<1x256xf32>
      %380 = vector.broadcast %378 : f32 to vector<1x256xf32>
      %381 = arith.mulf %380, %379 : vector<1x256xf32>
      %382 = arith.addf %372, %381 : vector<1x256xf32>
      %c25 = arith.constant 25 : index
      %383 = memref.load %arg2[%c25] : memref<98xf32, #tpu.memory_space<smem>>
      %384 = vector.extract_strided_slice %22 {offsets = [0, 52], sizes = [1, 256], strides = [1, 1]} : vector<1x358xf32> to vector<1x256xf32>
      %385 = vector.broadcast %383 : f32 to vector<1x256xf32>
      %386 = arith.mulf %385, %384 : vector<1x256xf32>
      %387 = arith.addf %377, %386 : vector<1x256xf32>
      %c74 = arith.constant 74 : index
      %388 = memref.load %arg2[%c74] : memref<98xf32, #tpu.memory_space<smem>>
      %389 = vector.extract_strided_slice %24 {offsets = [0, 52], sizes = [1, 256], strides = [1, 1]} : vector<1x358xf32> to vector<1x256xf32>
      %390 = vector.broadcast %388 : f32 to vector<1x256xf32>
      %391 = arith.mulf %390, %389 : vector<1x256xf32>
      %392 = arith.addf %382, %391 : vector<1x256xf32>
      %c32 = arith.constant 32 : index
      %393 = memref.load %arg2[%c32] : memref<98xf32, #tpu.memory_space<smem>>
      %394 = vector.extract_strided_slice %22 {offsets = [0, 68], sizes = [1, 256], strides = [1, 1]} : vector<1x358xf32> to vector<1x256xf32>
      %395 = vector.broadcast %393 : f32 to vector<1x256xf32>
      %396 = arith.mulf %395, %394 : vector<1x256xf32>
      %397 = arith.addf %387, %396 : vector<1x256xf32>
      %c81 = arith.constant 81 : index
      %398 = memref.load %arg2[%c81] : memref<98xf32, #tpu.memory_space<smem>>
      %399 = vector.extract_strided_slice %24 {offsets = [0, 68], sizes = [1, 256], strides = [1, 1]} : vector<1x358xf32> to vector<1x256xf32>
      %400 = vector.broadcast %398 : f32 to vector<1x256xf32>
      %401 = arith.mulf %400, %399 : vector<1x256xf32>
      %402 = arith.addf %392, %401 : vector<1x256xf32>
      %c39 = arith.constant 39 : index
      %403 = memref.load %arg2[%c39] : memref<98xf32, #tpu.memory_space<smem>>
      %404 = vector.extract_strided_slice %22 {offsets = [0, 84], sizes = [1, 256], strides = [1, 1]} : vector<1x358xf32> to vector<1x256xf32>
      %405 = vector.broadcast %403 : f32 to vector<1x256xf32>
      %406 = arith.mulf %405, %404 : vector<1x256xf32>
      %407 = arith.addf %397, %406 : vector<1x256xf32>
      %c88 = arith.constant 88 : index
      %408 = memref.load %arg2[%c88] : memref<98xf32, #tpu.memory_space<smem>>
      %409 = vector.extract_strided_slice %24 {offsets = [0, 84], sizes = [1, 256], strides = [1, 1]} : vector<1x358xf32> to vector<1x256xf32>
      %410 = vector.broadcast %408 : f32 to vector<1x256xf32>
      %411 = arith.mulf %410, %409 : vector<1x256xf32>
      %412 = arith.addf %402, %411 : vector<1x256xf32>
      %c46 = arith.constant 46 : index
      %413 = memref.load %arg2[%c46] : memref<98xf32, #tpu.memory_space<smem>>
      %414 = vector.extract_strided_slice %22 {offsets = [0, 100], sizes = [1, 256], strides = [1, 1]} : vector<1x358xf32> to vector<1x256xf32>
      %415 = vector.broadcast %413 : f32 to vector<1x256xf32>
      %416 = arith.mulf %415, %414 : vector<1x256xf32>
      %417 = arith.addf %407, %416 : vector<1x256xf32>
      %c95 = arith.constant 95 : index
      %418 = memref.load %arg2[%c95] : memref<98xf32, #tpu.memory_space<smem>>
      %419 = vector.extract_strided_slice %24 {offsets = [0, 100], sizes = [1, 256], strides = [1, 1]} : vector<1x358xf32> to vector<1x256xf32>
      %420 = vector.broadcast %418 : f32 to vector<1x256xf32>
      %421 = arith.mulf %420, %419 : vector<1x256xf32>
      %422 = arith.addf %412, %421 : vector<1x256xf32>
      %423 = arith.addf %417, %422 : vector<1x256xf32>
      %c-1_i32 = arith.constant -1 : i32
      %424 = vector.broadcast %c-1_i32 : i32 to vector<1x256xi32>
      %425 = arith.cmpi sge, %29, %424 : vector<1x256xi32>
      %c15_i32_36 = arith.constant 15 : i32
      %426 = vector.broadcast %c15_i32_36 : i32 to vector<1x256xi32>
      %427 = arith.cmpi slt, %29, %426 : vector<1x256xi32>
      %428 = arith.andi %425, %427 : vector<1x256xi1>
      %429 = arith.extui %428 : vector<1x256xi1> to vector<1x256xi32>
      %430 = arith.sitofp %429 : vector<1x256xi32> to vector<1x256xf32>
      %431 = arith.mulf %423, %430 : vector<1x256xf32>
      %432 = arith.addf %350, %431 : vector<1x256xf32>
      %cst_37 = arith.constant 0.000000e+00 : f32
      %433 = vector.broadcast %cst_37 : f32 to vector<1x256xf32>
      %cst_38 = arith.constant 0.000000e+00 : f32
      %434 = vector.broadcast %cst_38 : f32 to vector<1x256xf32>
      %c5 = arith.constant 5 : index
      %435 = memref.load %arg2[%c5] : memref<98xf32, #tpu.memory_space<smem>>
      %436 = vector.extract_strided_slice %22 {offsets = [0, 5], sizes = [1, 256], strides = [1, 1]} : vector<1x358xf32> to vector<1x256xf32>
      %437 = vector.broadcast %435 : f32 to vector<1x256xf32>
      %438 = arith.mulf %437, %436 : vector<1x256xf32>
      %439 = arith.addf %433, %438 : vector<1x256xf32>
      %c54 = arith.constant 54 : index
      %440 = memref.load %arg2[%c54] : memref<98xf32, #tpu.memory_space<smem>>
      %441 = vector.extract_strided_slice %24 {offsets = [0, 5], sizes = [1, 256], strides = [1, 1]} : vector<1x358xf32> to vector<1x256xf32>
      %442 = vector.broadcast %440 : f32 to vector<1x256xf32>
      %443 = arith.mulf %442, %441 : vector<1x256xf32>
      %444 = arith.addf %434, %443 : vector<1x256xf32>
      %c12 = arith.constant 12 : index
      %445 = memref.load %arg2[%c12] : memref<98xf32, #tpu.memory_space<smem>>
      %446 = vector.extract_strided_slice %22 {offsets = [0, 21], sizes = [1, 256], strides = [1, 1]} : vector<1x358xf32> to vector<1x256xf32>
      %447 = vector.broadcast %445 : f32 to vector<1x256xf32>
      %448 = arith.mulf %447, %446 : vector<1x256xf32>
      %449 = arith.addf %439, %448 : vector<1x256xf32>
      %c61 = arith.constant 61 : index
      %450 = memref.load %arg2[%c61] : memref<98xf32, #tpu.memory_space<smem>>
      %451 = vector.extract_strided_slice %24 {offsets = [0, 21], sizes = [1, 256], strides = [1, 1]} : vector<1x358xf32> to vector<1x256xf32>
      %452 = vector.broadcast %450 : f32 to vector<1x256xf32>
      %453 = arith.mulf %452, %451 : vector<1x256xf32>
      %454 = arith.addf %444, %453 : vector<1x256xf32>
      %c19 = arith.constant 19 : index
      %455 = memref.load %arg2[%c19] : memref<98xf32, #tpu.memory_space<smem>>
      %456 = vector.extract_strided_slice %22 {offsets = [0, 37], sizes = [1, 256], strides = [1, 1]} : vector<1x358xf32> to vector<1x256xf32>
      %457 = vector.broadcast %455 : f32 to vector<1x256xf32>
      %458 = arith.mulf %457, %456 : vector<1x256xf32>
      %459 = arith.addf %449, %458 : vector<1x256xf32>
      %c68 = arith.constant 68 : index
      %460 = memref.load %arg2[%c68] : memref<98xf32, #tpu.memory_space<smem>>
      %461 = vector.extract_strided_slice %24 {offsets = [0, 37], sizes = [1, 256], strides = [1, 1]} : vector<1x358xf32> to vector<1x256xf32>
      %462 = vector.broadcast %460 : f32 to vector<1x256xf32>
      %463 = arith.mulf %462, %461 : vector<1x256xf32>
      %464 = arith.addf %454, %463 : vector<1x256xf32>
      %c26 = arith.constant 26 : index
      %465 = memref.load %arg2[%c26] : memref<98xf32, #tpu.memory_space<smem>>
      %466 = vector.extract_strided_slice %22 {offsets = [0, 53], sizes = [1, 256], strides = [1, 1]} : vector<1x358xf32> to vector<1x256xf32>
      %467 = vector.broadcast %465 : f32 to vector<1x256xf32>
      %468 = arith.mulf %467, %466 : vector<1x256xf32>
      %469 = arith.addf %459, %468 : vector<1x256xf32>
      %c75 = arith.constant 75 : index
      %470 = memref.load %arg2[%c75] : memref<98xf32, #tpu.memory_space<smem>>
      %471 = vector.extract_strided_slice %24 {offsets = [0, 53], sizes = [1, 256], strides = [1, 1]} : vector<1x358xf32> to vector<1x256xf32>
      %472 = vector.broadcast %470 : f32 to vector<1x256xf32>
      %473 = arith.mulf %472, %471 : vector<1x256xf32>
      %474 = arith.addf %464, %473 : vector<1x256xf32>
      %c33 = arith.constant 33 : index
      %475 = memref.load %arg2[%c33] : memref<98xf32, #tpu.memory_space<smem>>
      %476 = vector.extract_strided_slice %22 {offsets = [0, 69], sizes = [1, 256], strides = [1, 1]} : vector<1x358xf32> to vector<1x256xf32>
      %477 = vector.broadcast %475 : f32 to vector<1x256xf32>
      %478 = arith.mulf %477, %476 : vector<1x256xf32>
      %479 = arith.addf %469, %478 : vector<1x256xf32>
      %c82 = arith.constant 82 : index
      %480 = memref.load %arg2[%c82] : memref<98xf32, #tpu.memory_space<smem>>
      %481 = vector.extract_strided_slice %24 {offsets = [0, 69], sizes = [1, 256], strides = [1, 1]} : vector<1x358xf32> to vector<1x256xf32>
      %482 = vector.broadcast %480 : f32 to vector<1x256xf32>
      %483 = arith.mulf %482, %481 : vector<1x256xf32>
      %484 = arith.addf %474, %483 : vector<1x256xf32>
      %c40 = arith.constant 40 : index
      %485 = memref.load %arg2[%c40] : memref<98xf32, #tpu.memory_space<smem>>
      %486 = vector.extract_strided_slice %22 {offsets = [0, 85], sizes = [1, 256], strides = [1, 1]} : vector<1x358xf32> to vector<1x256xf32>
      %487 = vector.broadcast %485 : f32 to vector<1x256xf32>
      %488 = arith.mulf %487, %486 : vector<1x256xf32>
      %489 = arith.addf %479, %488 : vector<1x256xf32>
      %c89 = arith.constant 89 : index
      %490 = memref.load %arg2[%c89] : memref<98xf32, #tpu.memory_space<smem>>
      %491 = vector.extract_strided_slice %24 {offsets = [0, 85], sizes = [1, 256], strides = [1, 1]} : vector<1x358xf32> to vector<1x256xf32>
      %492 = vector.broadcast %490 : f32 to vector<1x256xf32>
      %493 = arith.mulf %492, %491 : vector<1x256xf32>
      %494 = arith.addf %484, %493 : vector<1x256xf32>
      %c47 = arith.constant 47 : index
      %495 = memref.load %arg2[%c47] : memref<98xf32, #tpu.memory_space<smem>>
      %496 = vector.extract_strided_slice %22 {offsets = [0, 101], sizes = [1, 256], strides = [1, 1]} : vector<1x358xf32> to vector<1x256xf32>
      %497 = vector.broadcast %495 : f32 to vector<1x256xf32>
      %498 = arith.mulf %497, %496 : vector<1x256xf32>
      %499 = arith.addf %489, %498 : vector<1x256xf32>
      %c96 = arith.constant 96 : index
      %500 = memref.load %arg2[%c96] : memref<98xf32, #tpu.memory_space<smem>>
      %501 = vector.extract_strided_slice %24 {offsets = [0, 101], sizes = [1, 256], strides = [1, 1]} : vector<1x358xf32> to vector<1x256xf32>
      %502 = vector.broadcast %500 : f32 to vector<1x256xf32>
      %503 = arith.mulf %502, %501 : vector<1x256xf32>
      %504 = arith.addf %494, %503 : vector<1x256xf32>
      %505 = arith.addf %499, %504 : vector<1x256xf32>
      %c-2_i32 = arith.constant -2 : i32
      %506 = vector.broadcast %c-2_i32 : i32 to vector<1x256xi32>
      %507 = arith.cmpi sge, %29, %506 : vector<1x256xi32>
      %c14_i32 = arith.constant 14 : i32
      %508 = vector.broadcast %c14_i32 : i32 to vector<1x256xi32>
      %509 = arith.cmpi slt, %29, %508 : vector<1x256xi32>
      %510 = arith.andi %507, %509 : vector<1x256xi1>
      %511 = arith.extui %510 : vector<1x256xi1> to vector<1x256xi32>
      %512 = arith.sitofp %511 : vector<1x256xi32> to vector<1x256xf32>
      %513 = arith.mulf %505, %512 : vector<1x256xf32>
      %514 = arith.addf %432, %513 : vector<1x256xf32>
      %cst_39 = arith.constant 0.000000e+00 : f32
      %515 = vector.broadcast %cst_39 : f32 to vector<1x256xf32>
      %cst_40 = arith.constant 0.000000e+00 : f32
      %516 = vector.broadcast %cst_40 : f32 to vector<1x256xf32>
      %c6 = arith.constant 6 : index
      %517 = memref.load %arg2[%c6] : memref<98xf32, #tpu.memory_space<smem>>
      %518 = vector.extract_strided_slice %22 {offsets = [0, 6], sizes = [1, 256], strides = [1, 1]} : vector<1x358xf32> to vector<1x256xf32>
      %519 = vector.broadcast %517 : f32 to vector<1x256xf32>
      %520 = arith.mulf %519, %518 : vector<1x256xf32>
      %521 = arith.addf %515, %520 : vector<1x256xf32>
      %c55 = arith.constant 55 : index
      %522 = memref.load %arg2[%c55] : memref<98xf32, #tpu.memory_space<smem>>
      %523 = vector.extract_strided_slice %24 {offsets = [0, 6], sizes = [1, 256], strides = [1, 1]} : vector<1x358xf32> to vector<1x256xf32>
      %524 = vector.broadcast %522 : f32 to vector<1x256xf32>
      %525 = arith.mulf %524, %523 : vector<1x256xf32>
      %526 = arith.addf %516, %525 : vector<1x256xf32>
      %c13 = arith.constant 13 : index
      %527 = memref.load %arg2[%c13] : memref<98xf32, #tpu.memory_space<smem>>
      %528 = vector.extract_strided_slice %22 {offsets = [0, 22], sizes = [1, 256], strides = [1, 1]} : vector<1x358xf32> to vector<1x256xf32>
      %529 = vector.broadcast %527 : f32 to vector<1x256xf32>
      %530 = arith.mulf %529, %528 : vector<1x256xf32>
      %531 = arith.addf %521, %530 : vector<1x256xf32>
      %c62 = arith.constant 62 : index
      %532 = memref.load %arg2[%c62] : memref<98xf32, #tpu.memory_space<smem>>
      %533 = vector.extract_strided_slice %24 {offsets = [0, 22], sizes = [1, 256], strides = [1, 1]} : vector<1x358xf32> to vector<1x256xf32>
      %534 = vector.broadcast %532 : f32 to vector<1x256xf32>
      %535 = arith.mulf %534, %533 : vector<1x256xf32>
      %536 = arith.addf %526, %535 : vector<1x256xf32>
      %c20 = arith.constant 20 : index
      %537 = memref.load %arg2[%c20] : memref<98xf32, #tpu.memory_space<smem>>
      %538 = vector.extract_strided_slice %22 {offsets = [0, 38], sizes = [1, 256], strides = [1, 1]} : vector<1x358xf32> to vector<1x256xf32>
      %539 = vector.broadcast %537 : f32 to vector<1x256xf32>
      %540 = arith.mulf %539, %538 : vector<1x256xf32>
      %541 = arith.addf %531, %540 : vector<1x256xf32>
      %c69 = arith.constant 69 : index
      %542 = memref.load %arg2[%c69] : memref<98xf32, #tpu.memory_space<smem>>
      %543 = vector.extract_strided_slice %24 {offsets = [0, 38], sizes = [1, 256], strides = [1, 1]} : vector<1x358xf32> to vector<1x256xf32>
      %544 = vector.broadcast %542 : f32 to vector<1x256xf32>
      %545 = arith.mulf %544, %543 : vector<1x256xf32>
      %546 = arith.addf %536, %545 : vector<1x256xf32>
      %c27 = arith.constant 27 : index
      %547 = memref.load %arg2[%c27] : memref<98xf32, #tpu.memory_space<smem>>
      %548 = vector.extract_strided_slice %22 {offsets = [0, 54], sizes = [1, 256], strides = [1, 1]} : vector<1x358xf32> to vector<1x256xf32>
      %549 = vector.broadcast %547 : f32 to vector<1x256xf32>
      %550 = arith.mulf %549, %548 : vector<1x256xf32>
      %551 = arith.addf %541, %550 : vector<1x256xf32>
      %c76 = arith.constant 76 : index
      %552 = memref.load %arg2[%c76] : memref<98xf32, #tpu.memory_space<smem>>
      %553 = vector.extract_strided_slice %24 {offsets = [0, 54], sizes = [1, 256], strides = [1, 1]} : vector<1x358xf32> to vector<1x256xf32>
      %554 = vector.broadcast %552 : f32 to vector<1x256xf32>
      %555 = arith.mulf %554, %553 : vector<1x256xf32>
      %556 = arith.addf %546, %555 : vector<1x256xf32>
      %c34 = arith.constant 34 : index
      %557 = memref.load %arg2[%c34] : memref<98xf32, #tpu.memory_space<smem>>
      %558 = vector.extract_strided_slice %22 {offsets = [0, 70], sizes = [1, 256], strides = [1, 1]} : vector<1x358xf32> to vector<1x256xf32>
      %559 = vector.broadcast %557 : f32 to vector<1x256xf32>
      %560 = arith.mulf %559, %558 : vector<1x256xf32>
      %561 = arith.addf %551, %560 : vector<1x256xf32>
      %c83 = arith.constant 83 : index
      %562 = memref.load %arg2[%c83] : memref<98xf32, #tpu.memory_space<smem>>
      %563 = vector.extract_strided_slice %24 {offsets = [0, 70], sizes = [1, 256], strides = [1, 1]} : vector<1x358xf32> to vector<1x256xf32>
      %564 = vector.broadcast %562 : f32 to vector<1x256xf32>
      %565 = arith.mulf %564, %563 : vector<1x256xf32>
      %566 = arith.addf %556, %565 : vector<1x256xf32>
      %c41 = arith.constant 41 : index
      %567 = memref.load %arg2[%c41] : memref<98xf32, #tpu.memory_space<smem>>
      %568 = vector.extract_strided_slice %22 {offsets = [0, 86], sizes = [1, 256], strides = [1, 1]} : vector<1x358xf32> to vector<1x256xf32>
      %569 = vector.broadcast %567 : f32 to vector<1x256xf32>
      %570 = arith.mulf %569, %568 : vector<1x256xf32>
      %571 = arith.addf %561, %570 : vector<1x256xf32>
      %c90 = arith.constant 90 : index
      %572 = memref.load %arg2[%c90] : memref<98xf32, #tpu.memory_space<smem>>
      %573 = vector.extract_strided_slice %24 {offsets = [0, 86], sizes = [1, 256], strides = [1, 1]} : vector<1x358xf32> to vector<1x256xf32>
      %574 = vector.broadcast %572 : f32 to vector<1x256xf32>
      %575 = arith.mulf %574, %573 : vector<1x256xf32>
      %576 = arith.addf %566, %575 : vector<1x256xf32>
      %c48 = arith.constant 48 : index
      %577 = memref.load %arg2[%c48] : memref<98xf32, #tpu.memory_space<smem>>
      %578 = vector.extract_strided_slice %22 {offsets = [0, 102], sizes = [1, 256], strides = [1, 1]} : vector<1x358xf32> to vector<1x256xf32>
      %579 = vector.broadcast %577 : f32 to vector<1x256xf32>
      %580 = arith.mulf %579, %578 : vector<1x256xf32>
      %581 = arith.addf %571, %580 : vector<1x256xf32>
      %c97 = arith.constant 97 : index
      %582 = memref.load %arg2[%c97] : memref<98xf32, #tpu.memory_space<smem>>
      %583 = vector.extract_strided_slice %24 {offsets = [0, 102], sizes = [1, 256], strides = [1, 1]} : vector<1x358xf32> to vector<1x256xf32>
      %584 = vector.broadcast %582 : f32 to vector<1x256xf32>
      %585 = arith.mulf %584, %583 : vector<1x256xf32>
      %586 = arith.addf %576, %585 : vector<1x256xf32>
      %587 = arith.addf %581, %586 : vector<1x256xf32>
      %c-3_i32 = arith.constant -3 : i32
      %588 = vector.broadcast %c-3_i32 : i32 to vector<1x256xi32>
      %589 = arith.cmpi sge, %29, %588 : vector<1x256xi32>
      %c13_i32 = arith.constant 13 : i32
      %590 = vector.broadcast %c13_i32 : i32 to vector<1x256xi32>
      %591 = arith.cmpi slt, %29, %590 : vector<1x256xi32>
      %592 = arith.andi %589, %591 : vector<1x256xi1>
      %593 = arith.extui %592 : vector<1x256xi1> to vector<1x256xi32>
      %594 = arith.sitofp %593 : vector<1x256xi32> to vector<1x256xf32>
      %595 = arith.mulf %587, %594 : vector<1x256xf32>
      %596 = arith.addf %514, %595 : vector<1x256xf32>
      %597 = arith.negf %596 : vector<1x256xf32>
      %598 = math.exp %597 : vector<1x256xf32>
      %cst_41 = arith.constant 1.000000e+00 : f32
      %599 = vector.broadcast %cst_41 : f32 to vector<1x256xf32>
      %600 = arith.addf %599, %598 : vector<1x256xf32>
      %601 = arith.divf %599, %600 : vector<1x256xf32>
      %c0_42 = arith.constant 0 : index
      %c0_43 = arith.constant 0 : index
      %c0_44 = arith.constant 0 : index
      %602 = vector.load %arg4[%c0_42, %c0_43, %c0_44] : memref<1x1x256xf32, #tpu.memory_space<vmem>>, vector<1x1x256xf32>
      %603 = vector.shape_cast %602 : vector<1x1x256xf32> to vector<1x256xf32>
      %604 = vector.shape_cast %601 : vector<1x256xf32> to vector<1x1x256xf32>
      tpu.vector_store %arg4[%c0_42, %c0_43, %c0_44], %604 {strides = array<i32>} : memref<1x1x256xf32, #tpu.memory_space<vmem>>, vector<1x1x256xf32>,
    } else {
    }
    return
  }
  func.func @transform_0(%arg0: i32, %arg1: i32) -> i32 {
    %c0_i32 = arith.constant 0 : i32
    %c0_i32_0 = arith.constant 0 : i32
    return %c0_i32 : i32
  }
  func.func @transform_1(%arg0: i32, %arg1: i32) -> (i32, i32, i32) {
    %c0_i32 = arith.constant 0 : i32
    %c0_i32_0 = arith.constant 0 : i32
    return %arg0, %arg1, %c0_i32 : i32, i32, i32
  }
  func.func @transform_2(%arg0: i32, %arg1: i32) -> (i32, i32, i32) {
    %c0_i32 = arith.constant 0 : i32
    %c0_i32_0 = arith.constant 0 : i32
    %c0_i32_1 = arith.constant 0 : i32
    return %arg0, %c0_i32, %c0_i32_0 : i32, i32, i32
  }
}

</mosaic_0001>

<llo_original>
// kernel: tpu_custom_call.1
$region0: #{tpu_custom_call.1}
  #allocation0 [shape = 'u32[]', space=smem, size = 0x4, offset = 0x4, fixed_abs, tag = 'smem constant byte address 0x4 - core index']
  #allocation1 [shape = 'u32[144,128]{1,0:T(1,128)}', space=vmem, size = 0x12000, scoped, tag = 'internal scratch']
  #allocation2 [shape = 'f32[2,1,512]{2,1,0:T(1,128)}', space=vmem, size = 0x1000, scoped, tag = 'scratch operand']
  %s0 = inlined_call_operand.hbm [shape: f32[98], index: 0, kind: input, shape index: {}]
  %s1 = inlined_call_operand.hbm [shape: f32[2,4,256], index: 1, kind: input, shape index: {}]
  %s2 = inlined_call_operand.hbm [shape: f32[2,1,256], index: 2, kind: output, shape index: {}]
  %s3 = sld [smem:[#allocation0]]
  $region57: #{tpu_custom_call.1} parent=0
    _
  %s5 = ssub.s32 1, %s3
  %s6 = scalar_select 0, %s5, %s3
  $region1: #{tpu_custom_call.1} parent=0
    #allocation3 [shape = 'u8[512]{0}', space=smem, size = 0x200, scoped, tag = 'input window, operand 0, single buffered']
    #allocation4 [shape = 's32[2]{0}', space=sflag, size = 0x8, scoped, tag = 'scoped memory for tpu_custom_call.1']
    #allocation5 [shape = 's32[2]{0}', space=sflag, size = 0x8, scoped, tag = 'scoped memory for tpu_custom_call.1']
    #allocation6 [shape = 's32[2]{0}', space=sflag, size = 0x8, scoped, tag = 'scoped memory for tpu_custom_call.1']
    #allocation7 [shape = 'u8[8192]{0}', space=vmem, size = 0x2000, scoped, tag = 'input window, operand 1']
    #allocation8 [shape = 'u8[2048]{0}', space=vmem, size = 0x800, scoped, tag = 'output window, operand 0']
    %7 = vsyncpa [#allocation6], 0
    %8 = vsyncpa [#allocation4], 0
    %s9 = scalar_lea.sflag [#allocation4], 1
    %10 = vsyncpa %s9, 0
    %11 = vsyncpa [#allocation5], 0
    %s12 = scalar_lea.sflag [#allocation5], 1
    %13 = vsyncpa %s12, 0
    loop: start=0, step=1, limit=4
    $region2: #{tpu_custom_call.1} parent=1 // loop_pre_header
      _
    $region3: #{tpu_custom_call.1} parent=1 // loop_header
      %s15 = sphi 0, %s19
      %p16 = scmp.ge.s32.totalorder %s15, 4
      %s22 = sphi 0, %s34
      %s23 = sphi 0, %s30
      %s24 = sphi 0, %s22
      %s25 = sphi 0, %s23
      %s26 = sphi 0, %s24
      %s27 = sphi 0, %s25
      %s35 = sphi 0, %s35
      %s37 = sphi 0, %s35
      %s38 = sphi 0, %s37
      %s52 = sphi 0, %s38
      %s60 = sphi 0, %s62
      %s63 = sphi 0, %s60
      %s64 = sphi 0, %s63
      %s80 = sphi 0, %s64
      %s86 = sphi 0, %s88
      %s89 = sphi 0, %s86
      %s90 = sphi 0, %s89
      %s106 = sphi 0, %s90
    $region4: #{tpu_custom_call.1} parent=1 // loop_header_branch
      %18 = sbr.rel (%p16) target = $region8
    $region5: #{tpu_custom_call.1} parent=1 // loop_body
      %s20 = ssub.s32 %s15, 1
      %s21 = ssub.s32 %s15, 2
      %s28 = sadd.s32 1, %s23
      %p29 = scmp.ge.s32.totalorder %s28, 1
      %s30 = scalar_select %p29, 0, %s28
      %s31 = sadd.s32 1, %s22
      %s32 = scalar_select %p29, %s31, %s22
      %p33 = scmp.ge.s32.totalorder %s32, 2
      %s34 = scalar_select %p33, 0, %s32
      %s36 = sadd.s32 %s35, 1
      %p39 = scmp.eq.s32.totalorder %s15, 1
      %p40 = scmp.ne.s32.totalorder %s35, %s37
      %p41 = scmp.eq.s32.totalorder %s15, 0
      %p42 = por %p40, %p41
      %p43 = scmp.ne.s32.totalorder %s35, %s37
      %p44 = scmp.eq.s32.totalorder %s20, 1
      %p45 = por %p43, %p44
      %p46 = scmp.ne.s32.totalorder %s37, %s38
      %p47 = scmp.eq.s32.totalorder %s20, 0
      %p48 = por %p46, %p47
      %p49 = scmp.ne.s32.totalorder %s37, %s38
      %p50 = scmp.eq.s32.totalorder %s21, 1
      %p51 = por %p49, %p50
      %p53 = scmp.ne.s32.totalorder %s38, %s52
      %p54 = scmp.eq.s32.totalorder %s21, 0
      %p55 = por %p53, %p54
      %s56 = ssub.s32 %s22, %s34
      %s57 = ssub.s32 %s23, %s30
      %s58 = sor.u32 %s56, %s57
      %p59 = scmp.eq.s32.totalorder %s58, 0
      %s61 = sadd.s32 %s60, 1
      %s62 = scalar_select %p59, %s60, %s61
      %p65 = pneg %p59
      %p66 = scmp.eq.s32.totalorder %s15, 1
      %p67 = por %p65, %p66
      %p68 = scmp.ne.s32.totalorder %s60, %s63
      %p69 = scmp.eq.s32.totalorder %s15, 0
      %p70 = por %p68, %p69
      %p71 = scmp.ne.s32.totalorder %s60, %s63
      %p72 = scmp.eq.s32.totalorder %s20, 1
      %p73 = por %p71, %p72
      %p74 = scmp.ne.s32.totalorder %s63, %s64
      %p75 = scmp.eq.s32.totalorder %s20, 0
      %p76 = por %p74, %p75
      %p77 = scmp.ne.s32.totalorder %s63, %s64
      %p78 = scmp.eq.s32.totalorder %s21, 1
      %p79 = por %p77, %p78
      %p81 = scmp.ne.s32.totalorder %s64, %s80
      %p82 = scmp.eq.s32.totalorder %s21, 0
      %p83 = por %p81, %p82
      %s84 = ssub.s32 %s22, %s34
      %p85 = scmp.eq.s32.totalorder %s84, 0
      %s87 = sadd.s32 %s86, 1
      %s88 = scalar_select %p85, %s86, %s87
      %p91 = pneg %p85
      %p92 = scmp.eq.s32.totalorder %s15, 1
      %p93 = por %p91, %p92
      %p94 = scmp.ne.s32.totalorder %s86, %s89
      %p95 = scmp.eq.s32.totalorder %s15, 0
      %p96 = por %p94, %p95
      %p97 = scmp.ne.s32.totalorder %s86, %s89
      %p98 = scmp.eq.s32.totalorder %s20, 1
      %p99 = por %p97, %p98
      %p100 = scmp.ne.s32.totalorder %s89, %s90
      %p101 = scmp.eq.s32.totalorder %s20, 0
      %p102 = por %p100, %p101
      %p103 = scmp.ne.s32.totalorder %s89, %s90
      %p104 = scmp.eq.s32.totalorder %s21, 1
      %p105 = por %p103, %p104
      %p107 = scmp.ne.s32.totalorder %s90, %s106
      %p108 = scmp.eq.s32.totalorder %s21, 0
      %p109 = por %p107, %p108
      %p110 = scmp.le.s32.totalorder 1, %s15
      %p111 = scmp.lt.s32.totalorder %s15, 3
      %p112 = pnand %p110, %p111
      %p113 = pneg %p112
      // Predicated region
      $region9: #{tpu_custom_call.1} parent=5 // pred_check
        _
      $region10: #{tpu_custom_call.1} parent=5 // pred_check_branch
        %115 = sbr.rel (%p112) target = $region12
      $region11: #{tpu_custom_call.1} parent=5 // pred_region
        %s116 = ssub.s32 %s15, 1
        // Predicated region
        $region13: #{tpu_custom_call.1} parent=11 // pred_check
          %p117 = pneg %p48
        $region14: #{tpu_custom_call.1} parent=11 // pred_check_branch
          %119 = sbr.rel (%p117) target = $region16
        $region15: #{tpu_custom_call.1} parent=11 // pred_region
          %s121 = ssub.s32 16, 16
          %122 = vsyncadd [#allocation6], %s121
          %125 = dma.hbm_to_smem %s0, 16, [#allocation3], [#allocation6]
        $region16: #{tpu_custom_call.1} parent=11 // pred_fallthru
          _
      $region12: #{tpu_custom_call.1} parent=5 // pred_fallthru
        _
      %p126 = scmp.lt.s32.totalorder %s15, 2
      // Predicated region
      $region17: #{tpu_custom_call.1} parent=5 // pred_check
        %p127 = pneg %p126
      $region18: #{tpu_custom_call.1} parent=5 // pred_check_branch
        %129 = sbr.rel (%p127) target = $region20
      $region19: #{tpu_custom_call.1} parent=5 // pred_region
        // Predicated region
        $region21: #{tpu_custom_call.1} parent=19 // pred_check
          %p130 = pneg %p70
        $region22: #{tpu_custom_call.1} parent=19 // pred_check_branch
          %132 = sbr.rel (%p130) target = $region24
        $region23: #{tpu_custom_call.1} parent=19 // pred_region
          %s133 = sand.u32 %s60, 1
          %s134 = scalar_lea.sflag [#allocation4], %s133
          %s135 = sand.u32 %s60, 1
          %s136 = smul.addr %s135, 8
          %s137 = scalar_lea.vmem [#allocation7], %s136
          %s139 = ssub.s32 128, 128
          %140 = vsyncadd %s134, %s139
          %s141 = smul.addr %s23, 2
          %s142 = smul.addr %s22, 2
          %s143 = sadd.s32 %s141, %s142
          %s144 = smul.addr %s143, 64
          %s145 = scalar_lea.hbm %s1, %s144
          %s147 = sshll.u32 %s137, 4
          %s148 = int_to_ptr.vmem [resolvable:$true] %s147
          %150 = dma.hbm_to_vmem [thread:$0]  %s145, 128, %s148, %s134
        $region24: #{tpu_custom_call.1} parent=19 // pred_fallthru
          _
      $region20: #{tpu_custom_call.1} parent=5 // pred_fallthru
        _
      %p151 = scmp.le.s32.totalorder 1, %s15
      %p152 = scmp.lt.s32.totalorder %s15, 3
      %p153 = pnand %p151, %p152
      %p154 = pneg %p153
      // Predicated region
      $region25: #{tpu_custom_call.1} parent=5 // pred_check
        _
      $region26: #{tpu_custom_call.1} parent=5 // pred_check_branch
        %156 = sbr.rel (%p153) target = $region28
      $region27: #{tpu_custom_call.1} parent=5 // pred_region
        %s157 = ssub.s32 %s15, 1
        // Predicated region
        $region29: #{tpu_custom_call.1} parent=27 // pred_check
          %p158 = pneg %p48
        $region30: #{tpu_custom_call.1} parent=27 // pred_check_branch
          %160 = sbr.rel (%p158) target = $region32
        $region31: #{tpu_custom_call.1} parent=27 // pred_region
          %161 = dma.done [#allocation6], 16
        $region32: #{tpu_custom_call.1} parent=27 // pred_fallthru
          _
        %s162 = sand.u32 %s63, 1
        %s163 = scalar_lea.sflag [#allocation4], %s162
        %s164 = sand.u32 %s63, 1
        %s165 = smul.addr %s164, 8
        %s166 = scalar_lea.vmem [#allocation7], %s165
        // Predicated region
        $region33: #{tpu_custom_call.1} parent=27 // pred_check
          %p167 = pneg %p76
        $region34: #{tpu_custom_call.1} parent=27 // pred_check_branch
          %169 = sbr.rel (%p167) target = $region36
        $region35: #{tpu_custom_call.1} parent=27 // pred_region
          %170 = dma.done %s163, 128
        $region36: #{tpu_custom_call.1} parent=27 // pred_fallthru
          _
        %171 = sfence
        %p172 = pneg %p48
        %p173 = pneg %p45
        %s174 = sand.u32 %s63, 1
        %s175 = scalar_lea.sflag [#allocation4], %s174
        %s176 = sand.u32 %s63, 1
        %s177 = smul.addr %s176, 8
        %s178 = scalar_lea.vmem [#allocation7], %s177
        %p179 = pneg %p76
        %p180 = pneg %p73
        %p181 = pneg %p102
        %p182 = pneg %p99
        %s183 = sand.u32 %s89, 1
        %s184 = scalar_lea.sflag [#allocation5], %s183
        %s185 = sand.u32 %s89, 1
        %s186 = smul.addr %s185, 2
        %s187 = scalar_lea.vmem [#allocation8], %s186
        %p188 = scmp.eq.s32.totalorder %s25, 0
        // Predicated region
        $region37: #{tpu_custom_call.1} parent=27 // pred_check
          %p189 = pneg %p188
        $region38: #{tpu_custom_call.1} parent=27 // pred_check_branch
          %191 = sbr.rel (%p189) target = $region40
        $region39: #{tpu_custom_call.1} parent=27 // pred_region
          %v192 = vlaneseq
          %vm193 = vcmp.ge.s32.totalorder %v192, 0
          %vm194 = vcmp.lt.s32.totalorder %v192, 512
          %vm195 = vmand %vm193, %vm194
          %196 = vst.msk [vmem:[#allocation2] sm:$0xf] %vm195, 0.0
          %s197 = scalar_lea.vmem [#allocation2], 4
          %vm198 = vcmp.lt.s32.totalorder %v192, 128
          %vm199 = vmand %vm193, %vm198
          %200 = vst.msk [vmem:[%s197] sm:$0x1] %vm199, 0.0
          %201 = vst.msk [vmem:[%s197 + $0x3] sm:$0x1] %vm199, 0.0
          %vm202 = vcmp.lt.s32.totalorder %v192, 256
          %vm203 = vmand %vm193, %vm202
          %204 = vst.msk [vmem:[%s197 + $0x1] sm:$0x3] %vm203, -inf
        $region40: #{tpu_custom_call.1} parent=27 // pred_fallthru
          _
        %v205 = vld [vmem:[%s166] sm:$0xff]
        %v206 = vld [vmem:[#allocation2 + $0x1] sm:$0x3]
        %v208 = vcombine.high %v205, %v205
        %vm210 = vcmask 1043456
        %v211 = vsel %vm210, %v205, 0.0
        %v212 = vrot.slane %v211, 4
        %v213 = vadd.f32 %v211, %v212
        %v214 = vrot.slane %v213, 2
        %v215 = vadd.f32 %v213, %v214
        %v216 = vrot.slane %v215, 1
        %v217 = vadd.f32 %v215, %v216
        %v218 = vsel %vm210, %v208, 0.0
        %v219 = vrot.slane %v218, 4
        %v220 = vadd.f32 %v218, %v219
        %v221 = vrot.slane %v220, 2
        %v222 = vadd.f32 %v220, %v221
        %v223 = vrot.slane %v222, 1
        %v224 = vadd.f32 %v222, %v223
        %v227 = vcombine.low %v217, %v224
        %v229 = vunpack.c.l.s4 1966171168
        %v230 = vunpack.c.0.s8 %v229
        %v231 = vlaneseq
        %v232 = vshrl.u32 %v231, 7
        %v233 = vsub.s32 %v230, %v232
        %v234 = vrot.slane %v227, %v233
        %v236 = vunpack.c.l.s4 1966171168
        %v237 = vunpack.c.0.s8 %v236
        %v238 = vlaneseq
        %v239 = vshrl.u32 %v238, 7
        %v240 = vsub.s32 %v237, %v239
        %v241 = vrot.slane %v234, %v240
        %v243 = vadd.f32 %v206, %v241
        %v244 = vlaneseq
        %vm245 = vcmp.ge.s32.totalorder %v244, 0
        %vm246 = vcmp.lt.s32.totalorder %v244, 256
        %vm247 = vmand %vm245, %vm246
        %248 = vst.msk [vmem:[#allocation2 + $0x1] sm:$0x3] %vm247, %v243
        %s249 = scalar_lea.vmem [#allocation2], 4
        %v250 = vld [vmem:[%s249 + $0x1] sm:$0x3]
        %v251 = vsel %vm210, %v205, -inf
        %v252 = vrot.slane %v251, 4
        %v253 = vmax.f32 %v251, %v252
        %v254 = vrot.slane %v253, 2
        %v255 = vmax.f32 %v253, %v254
        %v256 = vrot.slane %v255, 1
        %v257 = vmax.f32 %v255, %v256
        %v258 = vsel %vm210, %v208, -inf
        %v259 = vrot.slane %v258, 4
        %v260 = vmax.f32 %v258, %v259
        %v261 = vrot.slane %v260, 2
        %v262 = vmax.f32 %v260, %v261
        %v263 = vrot.slane %v262, 1
        %v264 = vmax.f32 %v262, %v263
        %v267 = vcombine.low %v257, %v264
        %v269 = vunpack.c.l.s4 1966171168
        %v270 = vunpack.c.0.s8 %v269
        %v271 = vlaneseq
        %v272 = vshrl.u32 %v271, 7
        %v273 = vsub.s32 %v270, %v272
        %v274 = vrot.slane %v267, %v273
        %v276 = vunpack.c.l.s4 1966171168
        %v277 = vunpack.c.0.s8 %v276
        %v278 = vlaneseq
        %v279 = vshrl.u32 %v278, 7
        %v280 = vsub.s32 %v277, %v279
        %v281 = vrot.slane %v274, %v280
        %v283 = vmax.f32 %v250, %v281
        %284 = vst.msk [vmem:[%s249 + $0x1] sm:$0x3] %vm247, %v283
        // Predicated region
        $region41: #{tpu_custom_call.1} parent=27 // pred_check
          %p285 = pneg %p188
        $region42: #{tpu_custom_call.1} parent=27 // pred_check_branch
          %287 = sbr.rel (%p285) target = $region44
        $region43: #{tpu_custom_call.1} parent=27 // pred_region
          %v288 = vld [vmem:[#allocation2] sm:$0xf]
          %v289 = vld [vmem:[%s249] sm:$0xf]
          %v290 = vlaneseq
          %v291 = vand.u32 %v290, 127
          %v292 = vadd.s32 %v291, 128
          %v293 = vand.u32 %v291, 15
          %v294 = vand.u32 %v292, 15
          %s295 = sld [smem:[#allocation3]]
          %v296 = vstv %s295
          %v297 = vmul.f32 %v296, %v288
          %v298 = vadd.f32 %v297, 0.0
          %s299 = sld [smem:[#allocation3 + $0x31]]
          %v300 = vstv %s299
          %v301 = vmul.f32 %v300, %v289
          %v302 = vadd.f32 %v301, 0.0
          %s303 = sld [smem:[#allocation3 + $0x7]]
          %v304 = vstv %s303
          %v305 = vmul.f32 %v304, %v288
          %307 = vrot.lane.b32.xlu0 %v305, 112
          %v308 = vpop.permute.xlu0 %307
          %v309 = vrot.slane %v308, 1
          %vm310 = vcmask 916480
          %v311 = vsel %vm310, %v308, %v309
          %v313 = vadd.f32 %v298, %v311
          %s314 = sld [smem:[#allocation3 + $0x38]]
          %v315 = vstv %s314
          %v316 = vmul.f32 %v315, %v289
          %318 = vrot.lane.b32.xlu0 %v316, 112
          %v319 = vpop.permute.xlu0 %318
          %v320 = vrot.slane %v319, 1
          %v321 = vsel %vm310, %v319, %v320
          %v323 = vadd.f32 %v302, %v321
          %s324 = sld [smem:[#allocation3 + $0xe]]
          %v325 = vstv %s324
          %v326 = vmul.f32 %v325, %v288
          %328 = vrot.lane.b32.xlu0 %v326, 96
          %v329 = vpop.permute.xlu0 %328
          %v330 = vrot.slane %v329, 1
          %vm331 = vcmask 785408
          %v332 = vsel %vm331, %v329, %v330
          %v334 = vadd.f32 %v313, %v332
          %s335 = sld [smem:[#allocation3 + $0x3f]]
          %v336 = vstv %s335
          %v337 = vmul.f32 %v336, %v289
          %339 = vrot.lane.b32.xlu0 %v337, 96
          %v340 = vpop.permute.xlu0 %339
          %v341 = vrot.slane %v340, 1
          %v342 = vsel %vm331, %v340, %v341
          %v344 = vadd.f32 %v323, %v342
          %s345 = sld [smem:[#allocation3 + $0x15]]
          %v346 = vstv %s345
          %v347 = vmul.f32 %v346, %v288
          %349 = vrot.lane.b32.xlu0 %v347, 80
          %v350 = vpop.permute.xlu0 %349
          %v351 = vrot.slane %v350, 1
          %vm352 = vcmask 654336
          %v353 = vsel %vm352, %v350, %v351
          %v355 = vadd.f32 %v334, %v353
          %s356 = sld [smem:[#allocation3 + $0x46]]
          %v357 = vstv %s356
          %v358 = vmul.f32 %v357, %v289
          %360 = vrot.lane.b32.xlu0 %v358, 80
          %v361 = vpop.permute.xlu0 %360
          %v362 = vrot.slane %v361, 1
          %v363 = vsel %vm352, %v361, %v362
          %v365 = vadd.f32 %v344, %v363
          %s366 = sld [smem:[#allocation3 + $0x1c]]
          %v367 = vstv %s366
          %369 = vrot.lane.b32.xlu0 %v288, 115
          %v370 = vpop.permute.xlu0 %369
          %v371 = vrot.slane %v370, 1
          %v372 = vrot.slane %v370, 2
          %vm373 = vcmask 941056
          %v374 = vsel %vm373, %v371, %v372
          %v376 = vmul.f32 %v367, %v374
          %378 = vrot.lane.b32.xlu0 %v376, 77
          %v379 = vpop.permute.xlu0 %378
          %v380 = vrot.slane %v379, 7
          %vm381 = vcmask 629760
          %v382 = vsel %vm381, %v380, %v379
          %v384 = vadd.f32 %v355, %v382
          %s385 = sld [smem:[#allocation3 + $0x4d]]
          %v386 = vstv %s385
          %388 = vrot.lane.b32.xlu0 %v289, 115
          %v389 = vpop.permute.xlu0 %388
          %v390 = vrot.slane %v389, 1
          %v391 = vrot.slane %v389, 2
          %v392 = vsel %vm373, %v390, %v391
          %v394 = vmul.f32 %v386, %v392
          %396 = vrot.lane.b32.xlu0 %v394, 77
          %v397 = vpop.permute.xlu0 %396
          %v398 = vrot.slane %v397, 7
          %v399 = vsel %vm381, %v398, %v397
          %v401 = vadd.f32 %v365, %v399
          %s402 = sld [smem:[#allocation3 + $0x23]]
          %v403 = vstv %s402
          %404 = vrot.lane.b32.xlu0 %v288, 99
          %v405 = vpop.permute.xlu0 %404
          %v406 = vrot.slane %v405, 1
          %v407 = vrot.slane %v405, 2
          %vm408 = vcmask 809984
          %v409 = vsel %vm408, %v406, %v407
          %v411 = vmul.f32 %v403, %v409
          %413 = vrot.lane.b32.xlu0 %v411, 77
          %v414 = vpop.permute.xlu0 %413
          %v415 = vrot.slane %v414, 7
          %v416 = vsel %vm381, %v415, %v414
          %v418 = vadd.f32 %v384, %v416
          %s419 = sld [smem:[#allocation3 + $0x54]]
          %v420 = vstv %s419
          %421 = vrot.lane.b32.xlu0 %v289, 99
          %v422 = vpop.permute.xlu0 %421
          %v423 = vrot.slane %v422, 1
          %v424 = vrot.slane %v422, 2
          %v425 = vsel %vm408, %v423, %v424
          %v427 = vmul.f32 %v420, %v425
          %429 = vrot.lane.b32.xlu0 %v427, 77
          %v430 = vpop.permute.xlu0 %429
          %v431 = vrot.slane %v430, 7
          %v432 = vsel %vm381, %v431, %v430
          %v434 = vadd.f32 %v401, %v432
          %s435 = sld [smem:[#allocation3 + $0x2a]]
          %v436 = vstv %s435
          %437 = vrot.lane.b32.xlu0 %v288, 83
          %v438 = vpop.permute.xlu0 %437
          %v439 = vrot.slane %v438, 1
          %v440 = vrot.slane %v438, 2
          %vm441 = vcmask 678912
          %v442 = vsel %vm441, %v439, %v440
          %v444 = vmul.f32 %v436, %v442
          %446 = vrot.lane.b32.xlu0 %v444, 77
          %v447 = vpop.permute.xlu0 %446
          %v448 = vrot.slane %v447, 7
          %v449 = vsel %vm381, %v448, %v447
          %v451 = vadd.f32 %v418, %v449
          %s452 = sld [smem:[#allocation3 + $0x5b]]
          %v453 = vstv %s452
          %454 = vrot.lane.b32.xlu0 %v289, 83
          %v455 = vpop.permute.xlu0 %454
          %v456 = vrot.slane %v455, 1
          %v457 = vrot.slane %v455, 2
          %v458 = vsel %vm441, %v456, %v457
          %v460 = vmul.f32 %v453, %v458
          %462 = vrot.lane.b32.xlu0 %v460, 77
          %v463 = vpop.permute.xlu0 %462
          %v464 = vrot.slane %v463, 7
          %v465 = vsel %vm381, %v464, %v463
          %v467 = vadd.f32 %v434, %v465
          %v468 = vadd.f32 %v451, %v467
          %vm469 = vcmp.ge.s32.totalorder %v293, 3
          %vm470 = vcmp.ge.s32.totalorder %v294, 3
          %vm471 = vcmp.lt.s32.totalorder %v293, 19
          %vm472 = vcmp.lt.s32.totalorder %v294, 19
          %vm473 = vmand %vm469, %vm471
          %vm474 = vmand %vm470, %vm472
          %v475 = vsel %vm473, 1, 0
          %v476 = vsel %vm474, 1, 0
          %v477 = vcvt.s32.f32 %v475
          %v478 = vcvt.s32.f32 %v476
          %v481 = vcombine.low %v477, %v478
          %v483 = vunpack.c.l.s4 1966171168
          %v484 = vunpack.c.0.s8 %v483
          %v485 = vlaneseq
          %v486 = vshrl.u32 %v485, 7
          %v487 = vsub.s32 %v484, %v486
          %v488 = vrot.slane %v481, %v487
          %v490 = vunpack.c.l.s4 1966171168
          %v491 = vunpack.c.0.s8 %v490
          %v492 = vlaneseq
          %v493 = vshrl.u32 %v492, 7
          %v494 = vsub.s32 %v491, %v493
          %v495 = vrot.slane %v488, %v494
          %496 = vrot.lane.b32.xlu0 %v495, 77
          %v497 = vpop.permute.xlu0 %496
          %v498 = vrot.slane %v497, 7
          %v499 = vsel %vm381, %v498, %v497
          %v501 = vmul.f32 %v468, %v499
          %v502 = vadd.f32 %v501, 0.0
          %s503 = sld [smem:[#allocation3 + $0x1]]
          %v504 = vstv %s503
          %v505 = vmul.f32 %v504, %v288
          %v506 = vadd.f32 %v505, 0.0
          %s507 = sld [smem:[#allocation3 + $0x32]]
          %v508 = vstv %s507
          %v509 = vmul.f32 %v508, %v289
          %v510 = vadd.f32 %v509, 0.0
          %s511 = sld [smem:[#allocation3 + $0x8]]
          %v512 = vstv %s511
          %v513 = vmul.f32 %v512, %v288
          %515 = vrot.lane.b32.xlu0 %v513, 112
          %v516 = vpop.permute.xlu0 %515
          %v517 = vrot.slane %v516, 1
          %v518 = vsel %vm310, %v516, %v517
          %v520 = vadd.f32 %v506, %v518
          %s521 = sld [smem:[#allocation3 + $0x39]]
          %v522 = vstv %s521
          %v523 = vmul.f32 %v522, %v289
          %525 = vrot.lane.b32.xlu0 %v523, 112
          %v526 = vpop.permute.xlu0 %525
          %v527 = vrot.slane %v526, 1
          %v528 = vsel %vm310, %v526, %v527
          %v530 = vadd.f32 %v510, %v528
          %s531 = sld [smem:[#allocation3 + $0xf]]
          %v532 = vstv %s531
          %v533 = vmul.f32 %v532, %v288
          %535 = vrot.lane.b32.xlu0 %v533, 96
          %v536 = vpop.permute.xlu0 %535
          %v537 = vrot.slane %v536, 1
          %v538 = vsel %vm331, %v536, %v537
          %v540 = vadd.f32 %v520, %v538
          %s541 = sld [smem:[#allocation3 + $0x40]]
          %v542 = vstv %s541
          %v543 = vmul.f32 %v542, %v289
          %545 = vrot.lane.b32.xlu0 %v543, 96
          %v546 = vpop.permute.xlu0 %545
          %v547 = vrot.slane %v546, 1
          %v548 = vsel %vm331, %v546, %v547
          %v550 = vadd.f32 %v530, %v548
          %s551 = sld [smem:[#allocation3 + $0x16]]
          %v552 = vstv %s551
          %v553 = vmul.f32 %v552, %v288
          %555 = vrot.lane.b32.xlu0 %v553, 80
          %v556 = vpop.permute.xlu0 %555
          %v557 = vrot.slane %v556, 1
          %v558 = vsel %vm352, %v556, %v557
          %v560 = vadd.f32 %v540, %v558
          %s561 = sld [smem:[#allocation3 + $0x47]]
          %v562 = vstv %s561
          %v563 = vmul.f32 %v562, %v289
          %565 = vrot.lane.b32.xlu0 %v563, 80
          %v566 = vpop.permute.xlu0 %565
          %v567 = vrot.slane %v566, 1
          %v568 = vsel %vm352, %v566, %v567
          %v570 = vadd.f32 %v550, %v568
          %s571 = sld [smem:[#allocation3 + $0x1d]]
          %v572 = vstv %s571
          %573 = vrot.lane.b32.xlu0 %v288, 114
          %v574 = vpop.permute.xlu0 %573
          %v575 = vrot.slane %v574, 1
          %v576 = vrot.slane %v574, 2
          %vm577 = vcmask 932864
          %v578 = vsel %vm577, %v575, %v576
          %v580 = vmul.f32 %v572, %v578
          %582 = vrot.lane.b32.xlu0 %v580, 78
          %v583 = vpop.permute.xlu0 %582
          %v584 = vrot.slane %v583, 7
          %vm585 = vcmask 637952
          %v586 = vsel %vm585, %v584, %v583
          %v588 = vadd.f32 %v560, %v586
          %s589 = sld [smem:[#allocation3 + $0x4e]]
          %v590 = vstv %s589
          %591 = vrot.lane.b32.xlu0 %v289, 114
          %v592 = vpop.permute.xlu0 %591
          %v593 = vrot.slane %v592, 1
          %v594 = vrot.slane %v592, 2
          %v595 = vsel %vm577, %v593, %v594
          %v597 = vmul.f32 %v590, %v595
          %599 = vrot.lane.b32.xlu0 %v597, 78
          %v600 = vpop.permute.xlu0 %599
          %v601 = vrot.slane %v600, 7
          %v602 = vsel %vm585, %v601, %v600
          %v604 = vadd.f32 %v570, %v602
          %s605 = sld [smem:[#allocation3 + $0x24]]
          %v606 = vstv %s605
          %607 = vrot.lane.b32.xlu0 %v288, 98
          %v608 = vpop.permute.xlu0 %607
          %v609 = vrot.slane %v608, 1
          %v610 = vrot.slane %v608, 2
          %vm611 = vcmask 801792
          %v612 = vsel %vm611, %v609, %v610
          %v614 = vmul.f32 %v606, %v612
          %616 = vrot.lane.b32.xlu0 %v614, 78
          %v617 = vpop.permute.xlu0 %616
          %v618 = vrot.slane %v617, 7
          %v619 = vsel %vm585, %v618, %v617
          %v621 = vadd.f32 %v588, %v619
          %s622 = sld [smem:[#allocation3 + $0x55]]
          %v623 = vstv %s622
          %624 = vrot.lane.b32.xlu0 %v289, 98
          %v625 = vpop.permute.xlu0 %624
          %v626 = vrot.slane %v625, 1
          %v627 = vrot.slane %v625, 2
          %v628 = vsel %vm611, %v626, %v627
          %v630 = vmul.f32 %v623, %v628
          %632 = vrot.lane.b32.xlu0 %v630, 78
          %v633 = vpop.permute.xlu0 %632
          %v634 = vrot.slane %v633, 7
          %v635 = vsel %vm585, %v634, %v633
          %v637 = vadd.f32 %v604, %v635
          %s638 = sld [smem:[#allocation3 + $0x2b]]
          %v639 = vstv %s638
          %640 = vrot.lane.b32.xlu0 %v288, 82
          %v641 = vpop.permute.xlu0 %640
          %v642 = vrot.slane %v641, 1
          %v643 = vrot.slane %v641, 2
          %vm644 = vcmask 670720
          %v645 = vsel %vm644, %v642, %v643
          %v647 = vmul.f32 %v639, %v645
          %649 = vrot.lane.b32.xlu0 %v647, 78
          %v650 = vpop.permute.xlu0 %649
          %v651 = vrot.slane %v650, 7
          %v652 = vsel %vm585, %v651, %v650
          %v654 = vadd.f32 %v621, %v652
          %s655 = sld [smem:[#allocation3 + $0x5c]]
          %v656 = vstv %s655
          %657 = vrot.lane.b32.xlu0 %v289, 82
          %v658 = vpop.permute.xlu0 %657
          %v659 = vrot.slane %v658, 1
          %v660 = vrot.slane %v658, 2
          %v661 = vsel %vm644, %v659, %v660
          %v663 = vmul.f32 %v656, %v661
          %665 = vrot.lane.b32.xlu0 %v663, 78
          %v666 = vpop.permute.xlu0 %665
          %v667 = vrot.slane %v666, 7
          %v668 = vsel %vm585, %v667, %v666
          %v670 = vadd.f32 %v637, %v668
          %v671 = vadd.f32 %v654, %v670
          %vm672 = vcmp.ge.s32.totalorder %v293, 2
          %vm673 = vcmp.ge.s32.totalorder %v294, 2
          %vm674 = vcmp.lt.s32.totalorder %v293, 18
          %vm675 = vcmp.lt.s32.totalorder %v294, 18
          %vm676 = vmand %vm672, %vm674
          %vm677 = vmand %vm673, %vm675
          %v678 = vsel %vm676, 1, 0
          %v679 = vsel %vm677, 1, 0
          %v680 = vcvt.s32.f32 %v678
          %v681 = vcvt.s32.f32 %v679
          %v684 = vcombine.low %v680, %v681
          %v686 = vunpack.c.l.s4 1966171168
          %v687 = vunpack.c.0.s8 %v686
          %v688 = vlaneseq
          %v689 = vshrl.u32 %v688, 7
          %v690 = vsub.s32 %v687, %v689
          %v691 = vrot.slane %v684, %v690
          %v693 = vunpack.c.l.s4 1966171168
          %v694 = vunpack.c.0.s8 %v693
          %v695 = vlaneseq
          %v696 = vshrl.u32 %v695, 7
          %v697 = vsub.s32 %v694, %v696
          %v698 = vrot.slane %v691, %v697
          %699 = vrot.lane.b32.xlu0 %v698, 78
          %v700 = vpop.permute.xlu0 %699
          %v701 = vrot.slane %v700, 7
          %v702 = vsel %vm585, %v701, %v700
          %v704 = vmul.f32 %v671, %v702
          %706 = vrot.lane.b32.xlu0 %v704, 127
          %v707 = vpop.permute.xlu0 %706
          %v708 = vrot.slane %v707, 1
          %vm709 = vcmask 1039360
          %v710 = vsel %vm709, %v707, %v708
          %v712 = vadd.f32 %v502, %v710
          %s713 = sld [smem:[#allocation3 + $0x2]]
          %v714 = vstv %s713
          %v715 = vmul.f32 %v714, %v288
          %v716 = vadd.f32 %v715, 0.0
          %s717 = sld [smem:[#allocation3 + $0x33]]
          %v718 = vstv %s717
          %v719 = vmul.f32 %v718, %v289
          %v720 = vadd.f32 %v719, 0.0
          %s721 = sld [smem:[#allocation3 + $0x9]]
          %v722 = vstv %s721
          %v723 = vmul.f32 %v722, %v288
          %725 = vrot.lane.b32.xlu0 %v723, 112
          %v726 = vpop.permute.xlu0 %725
          %v727 = vrot.slane %v726, 1
          %v728 = vsel %vm310, %v726, %v727
          %v730 = vadd.f32 %v716, %v728
          %s731 = sld [smem:[#allocation3 + $0x3a]]
          %v732 = vstv %s731
          %v733 = vmul.f32 %v732, %v289
          %735 = vrot.lane.b32.xlu0 %v733, 112
          %v736 = vpop.permute.xlu0 %735
          %v737 = vrot.slane %v736, 1
          %v738 = vsel %vm310, %v736, %v737
          %v740 = vadd.f32 %v720, %v738
          %s741 = sld [smem:[#allocation3 + $0x10]]
          %v742 = vstv %s741
          %v743 = vmul.f32 %v742, %v288
          %745 = vrot.lane.b32.xlu0 %v743, 96
          %v746 = vpop.permute.xlu0 %745
          %v747 = vrot.slane %v746, 1
          %v748 = vsel %vm331, %v746, %v747
          %v750 = vadd.f32 %v730, %v748
          %s751 = sld [smem:[#allocation3 + $0x41]]
          %v752 = vstv %s751
          %v753 = vmul.f32 %v752, %v289
          %755 = vrot.lane.b32.xlu0 %v753, 96
          %v756 = vpop.permute.xlu0 %755
          %v757 = vrot.slane %v756, 1
          %v758 = vsel %vm331, %v756, %v757
          %v760 = vadd.f32 %v740, %v758
          %s761 = sld [smem:[#allocation3 + $0x17]]
          %v762 = vstv %s761
          %v763 = vmul.f32 %v762, %v288
          %765 = vrot.lane.b32.xlu0 %v763, 80
          %v766 = vpop.permute.xlu0 %765
          %v767 = vrot.slane %v766, 1
          %v768 = vsel %vm352, %v766, %v767
          %v770 = vadd.f32 %v750, %v768
          %s771 = sld [smem:[#allocation3 + $0x48]]
          %v772 = vstv %s771
          %v773 = vmul.f32 %v772, %v289
          %775 = vrot.lane.b32.xlu0 %v773, 80
          %v776 = vpop.permute.xlu0 %775
          %v777 = vrot.slane %v776, 1
          %v778 = vsel %vm352, %v776, %v777
          %v780 = vadd.f32 %v760, %v778
          %s781 = sld [smem:[#allocation3 + $0x1e]]
          %v782 = vstv %s781
          %783 = vrot.lane.b32.xlu0 %v288, 113
          %v784 = vpop.permute.xlu0 %783
          %v785 = vrot.slane %v784, 1
          %v786 = vrot.slane %v784, 2
          %vm787 = vcmask 924672
          %v788 = vsel %vm787, %v785, %v786
          %v790 = vmul.f32 %v782, %v788
          %792 = vrot.lane.b32.xlu0 %v790, 79
          %v793 = vpop.permute.xlu0 %792
          %v794 = vrot.slane %v793, 7
          %vm795 = vcmask 646144
          %v796 = vsel %vm795, %v794, %v793
          %v798 = vadd.f32 %v770, %v796
          %s799 = sld [smem:[#allocation3 + $0x4f]]
          %v800 = vstv %s799
          %801 = vrot.lane.b32.xlu0 %v289, 113
          %v802 = vpop.permute.xlu0 %801
          %v803 = vrot.slane %v802, 1
          %v804 = vrot.slane %v802, 2
          %v805 = vsel %vm787, %v803, %v804
          %v807 = vmul.f32 %v800, %v805
          %809 = vrot.lane.b32.xlu0 %v807, 79
          %v810 = vpop.permute.xlu0 %809
          %v811 = vrot.slane %v810, 7
          %v812 = vsel %vm795, %v811, %v810
          %v814 = vadd.f32 %v780, %v812
          %s815 = sld [smem:[#allocation3 + $0x25]]
          %v816 = vstv %s815
          %817 = vrot.lane.b32.xlu0 %v288, 97
          %v818 = vpop.permute.xlu0 %817
          %v819 = vrot.slane %v818, 1
          %v820 = vrot.slane %v818, 2
          %vm821 = vcmask 793600
          %v822 = vsel %vm821, %v819, %v820
          %v824 = vmul.f32 %v816, %v822
          %826 = vrot.lane.b32.xlu0 %v824, 79
          %v827 = vpop.permute.xlu0 %826
          %v828 = vrot.slane %v827, 7
          %v829 = vsel %vm795, %v828, %v827
          %v831 = vadd.f32 %v798, %v829
          %s832 = sld [smem:[#allocation3 + $0x56]]
          %v833 = vstv %s832
          %834 = vrot.lane.b32.xlu0 %v289, 97
          %v835 = vpop.permute.xlu0 %834
          %v836 = vrot.slane %v835, 1
          %v837 = vrot.slane %v835, 2
          %v838 = vsel %vm821, %v836, %v837
          %v840 = vmul.f32 %v833, %v838
          %842 = vrot.lane.b32.xlu0 %v840, 79
          %v843 = vpop.permute.xlu0 %842
          %v844 = vrot.slane %v843, 7
          %v845 = vsel %vm795, %v844, %v843
          %v847 = vadd.f32 %v814, %v845
          %s848 = sld [smem:[#allocation3 + $0x2c]]
          %v849 = vstv %s848
          %850 = vrot.lane.b32.xlu0 %v288, 81
          %v851 = vpop.permute.xlu0 %850
          %v852 = vrot.slane %v851, 1
          %v853 = vrot.slane %v851, 2
          %vm854 = vcmask 662528
          %v855 = vsel %vm854, %v852, %v853
          %v857 = vmul.f32 %v849, %v855
          %859 = vrot.lane.b32.xlu0 %v857, 79
          %v860 = vpop.permute.xlu0 %859
          %v861 = vrot.slane %v860, 7
          %v862 = vsel %vm795, %v861, %v860
          %v864 = vadd.f32 %v831, %v862
          %s865 = sld [smem:[#allocation3 + $0x5d]]
          %v866 = vstv %s865
          %867 = vrot.lane.b32.xlu0 %v289, 81
          %v868 = vpop.permute.xlu0 %867
          %v869 = vrot.slane %v868, 1
          %v870 = vrot.slane %v868, 2
          %v871 = vsel %vm854, %v869, %v870
          %v873 = vmul.f32 %v866, %v871
          %875 = vrot.lane.b32.xlu0 %v873, 79
          %v876 = vpop.permute.xlu0 %875
          %v877 = vrot.slane %v876, 7
          %v878 = vsel %vm795, %v877, %v876
          %v880 = vadd.f32 %v847, %v878
          %v881 = vadd.f32 %v864, %v880
          %vm882 = vcmp.ge.s32.totalorder %v293, 1
          %vm883 = vcmp.ge.s32.totalorder %v294, 1
          %vm884 = vcmp.lt.s32.totalorder %v293, 17
          %vm885 = vcmp.lt.s32.totalorder %v294, 17
          %vm886 = vmand %vm882, %vm884
          %vm887 = vmand %vm883, %vm885
          %v888 = vsel %vm886, 1, 0
          %v889 = vsel %vm887, 1, 0
          %v890 = vcvt.s32.f32 %v888
          %v891 = vcvt.s32.f32 %v889
          %v894 = vcombine.low %v890, %v891
          %v896 = vunpack.c.l.s4 1966171168
          %v897 = vunpack.c.0.s8 %v896
          %v898 = vlaneseq
          %v899 = vshrl.u32 %v898, 7
          %v900 = vsub.s32 %v897, %v899
          %v901 = vrot.slane %v894, %v900
          %v903 = vunpack.c.l.s4 1966171168
          %v904 = vunpack.c.0.s8 %v903
          %v905 = vlaneseq
          %v906 = vshrl.u32 %v905, 7
          %v907 = vsub.s32 %v904, %v906
          %v908 = vrot.slane %v901, %v907
          %909 = vrot.lane.b32.xlu0 %v908, 79
          %v910 = vpop.permute.xlu0 %909
          %v911 = vrot.slane %v910, 7
          %v912 = vsel %vm795, %v911, %v910
          %v914 = vmul.f32 %v881, %v912
          %916 = vrot.lane.b32.xlu0 %v914, 126
          %v917 = vpop.permute.xlu0 %916
          %v918 = vrot.slane %v917, 1
          %vm919 = vcmask 1031168
          %v920 = vsel %vm919, %v917, %v918
          %v922 = vadd.f32 %v712, %v920
          %s923 = sld [smem:[#allocation3 + $0x3]]
          %v924 = vstv %s923
          %v925 = vmul.f32 %v924, %v288
          %v926 = vadd.f32 %v925, 0.0
          %s927 = sld [smem:[#allocation3 + $0x34]]
          %v928 = vstv %s927
          %v929 = vmul.f32 %v928, %v289
          %v930 = vadd.f32 %v929, 0.0
          %s931 = sld [smem:[#allocation3 + $0xa]]
          %v932 = vstv %s931
          %v933 = vmul.f32 %v932, %v288
          %935 = vrot.lane.b32.xlu0 %v933, 112
          %v936 = vpop.permute.xlu0 %935
          %v937 = vrot.slane %v936, 1
          %v938 = vsel %vm310, %v936, %v937
          %v940 = vadd.f32 %v926, %v938
          %s941 = sld [smem:[#allocation3 + $0x3b]]
          %v942 = vstv %s941
          %v943 = vmul.f32 %v942, %v289
          %945 = vrot.lane.b32.xlu0 %v943, 112
          %v946 = vpop.permute.xlu0 %945
          %v947 = vrot.slane %v946, 1
          %v948 = vsel %vm310, %v946, %v947
          %v950 = vadd.f32 %v930, %v948
          %s951 = sld [smem:[#allocation3 + $0x11]]
          %v952 = vstv %s951
          %v953 = vmul.f32 %v952, %v288
          %955 = vrot.lane.b32.xlu0 %v953, 96
          %v956 = vpop.permute.xlu0 %955
          %v957 = vrot.slane %v956, 1
          %v958 = vsel %vm331, %v956, %v957
          %v960 = vadd.f32 %v940, %v958
          %s961 = sld [smem:[#allocation3 + $0x42]]
          %v962 = vstv %s961
          %v963 = vmul.f32 %v962, %v289
          %965 = vrot.lane.b32.xlu0 %v963, 96
          %v966 = vpop.permute.xlu0 %965
          %v967 = vrot.slane %v966, 1
          %v968 = vsel %vm331, %v966, %v967
          %v970 = vadd.f32 %v950, %v968
          %s971 = sld [smem:[#allocation3 + $0x18]]
          %v972 = vstv %s971
          %v973 = vrot.slane %v288, 1
          %v975 = vmul.f32 %v972, %v973
          %977 = vrot.lane.b32.xlu0 %v975, 80
          %v978 = vpop.permute.xlu0 %977
          %v979 = vrot.slane %v978, 7
          %v980 = vsel %vm352, %v979, %v978
          %v982 = vadd.f32 %v960, %v980
          %s983 = sld [smem:[#allocation3 + $0x49]]
          %v984 = vstv %s983
          %v985 = vrot.slane %v289, 1
          %v987 = vmul.f32 %v984, %v985
          %989 = vrot.lane.b32.xlu0 %v987, 80
          %v990 = vpop.permute.xlu0 %989
          %v991 = vrot.slane %v990, 7
          %v992 = vsel %vm352, %v991, %v990
          %v994 = vadd.f32 %v970, %v992
          %s995 = sld [smem:[#allocation3 + $0x1f]]
          %v996 = vstv %s995
          %997 = vrot.lane.b32.xlu0 %v288, 112
          %v998 = vpop.permute.xlu0 %997
          %v999 = vrot.slane %v998, 1
          %v1000 = vrot.slane %v998, 2
          %v1001 = vsel %vm310, %v999, %v1000
          %v1003 = vmul.f32 %v996, %v1001
          %1005 = vrot.lane.b32.xlu0 %v1003, 80
          %v1006 = vpop.permute.xlu0 %1005
          %v1007 = vrot.slane %v1006, 7
          %v1008 = vsel %vm352, %v1007, %v1006
          %v1010 = vadd.f32 %v982, %v1008
          %s1011 = sld [smem:[#allocation3 + $0x50]]
          %v1012 = vstv %s1011
          %1013 = vrot.lane.b32.xlu0 %v289, 112
          %v1014 = vpop.permute.xlu0 %1013
          %v1015 = vrot.slane %v1014, 1
          %v1016 = vrot.slane %v1014, 2
          %v1017 = vsel %vm310, %v1015, %v1016
          %v1019 = vmul.f32 %v1012, %v1017
          %1021 = vrot.lane.b32.xlu0 %v1019, 80
          %v1022 = vpop.permute.xlu0 %1021
          %v1023 = vrot.slane %v1022, 7
          %v1024 = vsel %vm352, %v1023, %v1022
          %v1026 = vadd.f32 %v994, %v1024
          %s1027 = sld [smem:[#allocation3 + $0x26]]
          %v1028 = vstv %s1027
          %1029 = vrot.lane.b32.xlu0 %v288, 96
          %v1030 = vpop.permute.xlu0 %1029
          %v1031 = vrot.slane %v1030, 1
          %v1032 = vrot.slane %v1030, 2
          %v1033 = vsel %vm331, %v1031, %v1032
          %v1035 = vmul.f32 %v1028, %v1033
          %1037 = vrot.lane.b32.xlu0 %v1035, 80
          %v1038 = vpop.permute.xlu0 %1037
          %v1039 = vrot.slane %v1038, 7
          %v1040 = vsel %vm352, %v1039, %v1038
          %v1042 = vadd.f32 %v1010, %v1040
          %s1043 = sld [smem:[#allocation3 + $0x57]]
          %v1044 = vstv %s1043
          %1045 = vrot.lane.b32.xlu0 %v289, 96
          %v1046 = vpop.permute.xlu0 %1045
          %v1047 = vrot.slane %v1046, 1
          %v1048 = vrot.slane %v1046, 2
          %v1049 = vsel %vm331, %v1047, %v1048
          %v1051 = vmul.f32 %v1044, %v1049
          %1053 = vrot.lane.b32.xlu0 %v1051, 80
          %v1054 = vpop.permute.xlu0 %1053
          %v1055 = vrot.slane %v1054, 7
          %v1056 = vsel %vm352, %v1055, %v1054
          %v1058 = vadd.f32 %v1026, %v1056
          %s1059 = sld [smem:[#allocation3 + $0x2d]]
          %v1060 = vstv %s1059
          %1061 = vrot.lane.b32.xlu0 %v288, 80
          %v1062 = vpop.permute.xlu0 %1061
          %v1063 = vrot.slane %v1062, 1
          %v1064 = vrot.slane %v1062, 2
          %v1065 = vsel %vm352, %v1063, %v1064
          %v1067 = vmul.f32 %v1060, %v1065
          %1069 = vrot.lane.b32.xlu0 %v1067, 80
          %v1070 = vpop.permute.xlu0 %1069
          %v1071 = vrot.slane %v1070, 7
          %v1072 = vsel %vm352, %v1071, %v1070
          %v1074 = vadd.f32 %v1042, %v1072
          %s1075 = sld [smem:[#allocation3 + $0x5e]]
          %v1076 = vstv %s1075
          %1077 = vrot.lane.b32.xlu0 %v289, 80
          %v1078 = vpop.permute.xlu0 %1077
          %v1079 = vrot.slane %v1078, 1
          %v1080 = vrot.slane %v1078, 2
          %v1081 = vsel %vm352, %v1079, %v1080
          %v1083 = vmul.f32 %v1076, %v1081
          %1085 = vrot.lane.b32.xlu0 %v1083, 80
          %v1086 = vpop.permute.xlu0 %1085
          %v1087 = vrot.slane %v1086, 7
          %v1088 = vsel %vm352, %v1087, %v1086
          %v1090 = vadd.f32 %v1058, %v1088
          %v1091 = vadd.f32 %v1074, %v1090
          %1093 = vrot.lane.b32.xlu0 %v1091, 125
          %v1094 = vpop.permute.xlu0 %1093
          %v1095 = vrot.slane %v1094, 1
          %vm1096 = vcmask 1022976
          %v1097 = vsel %vm1096, %v1094, %v1095
          %v1099 = vadd.f32 %v922, %v1097
          %s1100 = sld [smem:[#allocation3 + $0x4]]
          %v1101 = vstv %s1100
          %v1102 = vmul.f32 %v1101, %v288
          %v1103 = vadd.f32 %v1102, 0.0
          %s1104 = sld [smem:[#allocation3 + $0x35]]
          %v1105 = vstv %s1104
          %v1106 = vmul.f32 %v1105, %v289
          %v1107 = vadd.f32 %v1106, 0.0
          %s1108 = sld [smem:[#allocation3 + $0xb]]
          %v1109 = vstv %s1108
          %v1110 = vmul.f32 %v1109, %v288
          %1112 = vrot.lane.b32.xlu0 %v1110, 112
          %v1113 = vpop.permute.xlu0 %1112
          %v1114 = vrot.slane %v1113, 1
          %v1115 = vsel %vm310, %v1113, %v1114
          %v1117 = vadd.f32 %v1103, %v1115
          %s1118 = sld [smem:[#allocation3 + $0x3c]]
          %v1119 = vstv %s1118
          %v1120 = vmul.f32 %v1119, %v289
          %1122 = vrot.lane.b32.xlu0 %v1120, 112
          %v1123 = vpop.permute.xlu0 %1122
          %v1124 = vrot.slane %v1123, 1
          %v1125 = vsel %vm310, %v1123, %v1124
          %v1127 = vadd.f32 %v1107, %v1125
          %s1128 = sld [smem:[#allocation3 + $0x12]]
          %v1129 = vstv %s1128
          %v1130 = vmul.f32 %v1129, %v288
          %1132 = vrot.lane.b32.xlu0 %v1130, 96
          %v1133 = vpop.permute.xlu0 %1132
          %v1134 = vrot.slane %v1133, 1
          %v1135 = vsel %vm331, %v1133, %v1134
          %v1137 = vadd.f32 %v1117, %v1135
          %s1138 = sld [smem:[#allocation3 + $0x43]]
          %v1139 = vstv %s1138
          %v1140 = vmul.f32 %v1139, %v289
          %1142 = vrot.lane.b32.xlu0 %v1140, 96
          %v1143 = vpop.permute.xlu0 %1142
          %v1144 = vrot.slane %v1143, 1
          %v1145 = vsel %vm331, %v1143, %v1144
          %v1147 = vadd.f32 %v1127, %v1145
          %s1148 = sld [smem:[#allocation3 + $0x19]]
          %v1149 = vstv %s1148
          %1150 = vrot.lane.b32.xlu0 %v288, 127
          %v1151 = vpop.permute.xlu0 %1150
          %v1152 = vrot.slane %v1151, 1
          %v1153 = vrot.slane %v1151, 2
          %v1154 = vsel %vm709, %v1152, %v1153
          %v1156 = vmul.f32 %v1149, %v1154
          %1158 = vrot.lane.b32.xlu0 %v1156, 81
          %v1159 = vpop.permute.xlu0 %1158
          %v1160 = vrot.slane %v1159, 7
          %v1161 = vsel %vm854, %v1160, %v1159
          %v1163 = vadd.f32 %v1137, %v1161
          %s1164 = sld [smem:[#allocation3 + $0x4a]]
          %v1165 = vstv %s1164
          %1166 = vrot.lane.b32.xlu0 %v289, 127
          %v1167 = vpop.permute.xlu0 %1166
          %v1168 = vrot.slane %v1167, 1
          %v1169 = vrot.slane %v1167, 2
          %v1170 = vsel %vm709, %v1168, %v1169
          %v1172 = vmul.f32 %v1165, %v1170
          %1174 = vrot.lane.b32.xlu0 %v1172, 81
          %v1175 = vpop.permute.xlu0 %1174
          %v1176 = vrot.slane %v1175, 7
          %v1177 = vsel %vm854, %v1176, %v1175
          %v1179 = vadd.f32 %v1147, %v1177
          %s1180 = sld [smem:[#allocation3 + $0x20]]
          %v1181 = vstv %s1180
          %1182 = vrot.lane.b32.xlu0 %v288, 111
          %v1183 = vpop.permute.xlu0 %1182
          %v1184 = vrot.slane %v1183, 1
          %v1185 = vrot.slane %v1183, 2
          %vm1186 = vcmask 908288
          %v1187 = vsel %vm1186, %v1184, %v1185
          %v1189 = vmul.f32 %v1181, %v1187
          %1191 = vrot.lane.b32.xlu0 %v1189, 81
          %v1192 = vpop.permute.xlu0 %1191
          %v1193 = vrot.slane %v1192, 7
          %v1194 = vsel %vm854, %v1193, %v1192
          %v1196 = vadd.f32 %v1163, %v1194
          %s1197 = sld [smem:[#allocation3 + $0x51]]
          %v1198 = vstv %s1197
          %1199 = vrot.lane.b32.xlu0 %v289, 111
          %v1200 = vpop.permute.xlu0 %1199
          %v1201 = vrot.slane %v1200, 1
          %v1202 = vrot.slane %v1200, 2
          %v1203 = vsel %vm1186, %v1201, %v1202
          %v1205 = vmul.f32 %v1198, %v1203
          %1207 = vrot.lane.b32.xlu0 %v1205, 81
          %v1208 = vpop.permute.xlu0 %1207
          %v1209 = vrot.slane %v1208, 7
          %v1210 = vsel %vm854, %v1209, %v1208
          %v1212 = vadd.f32 %v1179, %v1210
          %s1213 = sld [smem:[#allocation3 + $0x27]]
          %v1214 = vstv %s1213
          %1215 = vrot.lane.b32.xlu0 %v288, 95
          %v1216 = vpop.permute.xlu0 %1215
          %v1217 = vrot.slane %v1216, 1
          %v1218 = vrot.slane %v1216, 2
          %vm1219 = vcmask 777216
          %v1220 = vsel %vm1219, %v1217, %v1218
          %v1222 = vmul.f32 %v1214, %v1220
          %1224 = vrot.lane.b32.xlu0 %v1222, 81
          %v1225 = vpop.permute.xlu0 %1224
          %v1226 = vrot.slane %v1225, 7
          %v1227 = vsel %vm854, %v1226, %v1225
          %v1229 = vadd.f32 %v1196, %v1227
          %s1230 = sld [smem:[#allocation3 + $0x58]]
          %v1231 = vstv %s1230
          %1232 = vrot.lane.b32.xlu0 %v289, 95
          %v1233 = vpop.permute.xlu0 %1232
          %v1234 = vrot.slane %v1233, 1
          %v1235 = vrot.slane %v1233, 2
          %v1236 = vsel %vm1219, %v1234, %v1235
          %v1238 = vmul.f32 %v1231, %v1236
          %1240 = vrot.lane.b32.xlu0 %v1238, 81
          %v1241 = vpop.permute.xlu0 %1240
          %v1242 = vrot.slane %v1241, 7
          %v1243 = vsel %vm854, %v1242, %v1241
          %v1245 = vadd.f32 %v1212, %v1243
          %s1246 = sld [smem:[#allocation3 + $0x2e]]
          %v1247 = vstv %s1246
          %1248 = vrot.lane.b32.xlu0 %v288, 79
          %v1249 = vpop.permute.xlu0 %1248
          %v1250 = vrot.slane %v1249, 1
          %v1251 = vrot.slane %v1249, 2
          %v1252 = vsel %vm795, %v1250, %v1251
          %v1254 = vmul.f32 %v1247, %v1252
          %1256 = vrot.lane.b32.xlu0 %v1254, 81
          %v1257 = vpop.permute.xlu0 %1256
          %v1258 = vrot.slane %v1257, 7
          %v1259 = vsel %vm854, %v1258, %v1257
          %v1261 = vadd.f32 %v1229, %v1259
          %s1262 = sld [smem:[#allocation3 + $0x5f]]
          %v1263 = vstv %s1262
          %1264 = vrot.lane.b32.xlu0 %v289, 79
          %v1265 = vpop.permute.xlu0 %1264
          %v1266 = vrot.slane %v1265, 1
          %v1267 = vrot.slane %v1265, 2
          %v1268 = vsel %vm795, %v1266, %v1267
          %v1270 = vmul.f32 %v1263, %v1268
          %1272 = vrot.lane.b32.xlu0 %v1270, 81
          %v1273 = vpop.permute.xlu0 %1272
          %v1274 = vrot.slane %v1273, 7
          %v1275 = vsel %vm854, %v1274, %v1273
          %v1277 = vadd.f32 %v1245, %v1275
          %v1278 = vadd.f32 %v1261, %v1277
          %vm1279 = vcmp.ge.s32.totalorder %v293, 4294967295
          %vm1280 = vcmp.ge.s32.totalorder %v294, 4294967295
          %vm1281 = vcmp.lt.s32.totalorder %v293, 15
          %vm1282 = vcmp.lt.s32.totalorder %v294, 15
          %vm1283 = vmand %vm1279, %vm1281
          %vm1284 = vmand %vm1280, %vm1282
          %v1285 = vsel %vm1283, 1, 0
          %v1286 = vsel %vm1284, 1, 0
          %v1287 = vcvt.s32.f32 %v1285
          %v1288 = vcvt.s32.f32 %v1286
          %v1291 = vcombine.low %v1287, %v1288
          %v1293 = vunpack.c.l.s4 1966171168
          %v1294 = vunpack.c.0.s8 %v1293
          %v1295 = vlaneseq
          %v1296 = vshrl.u32 %v1295, 7
          %v1297 = vsub.s32 %v1294, %v1296
          %v1298 = vrot.slane %v1291, %v1297
          %v1300 = vunpack.c.l.s4 1966171168
          %v1301 = vunpack.c.0.s8 %v1300
          %v1302 = vlaneseq
          %v1303 = vshrl.u32 %v1302, 7
          %v1304 = vsub.s32 %v1301, %v1303
          %v1305 = vrot.slane %v1298, %v1304
          %1306 = vrot.lane.b32.xlu0 %v1305, 81
          %v1307 = vpop.permute.xlu0 %1306
          %v1308 = vrot.slane %v1307, 7
          %v1309 = vsel %vm854, %v1308, %v1307
          %v1311 = vmul.f32 %v1278, %v1309
          %1313 = vrot.lane.b32.xlu0 %v1311, 124
          %v1314 = vpop.permute.xlu0 %1313
          %v1315 = vrot.slane %v1314, 1
          %vm1316 = vcmask 1014784
          %v1317 = vsel %vm1316, %v1314, %v1315
          %v1319 = vadd.f32 %v1099, %v1317
          %s1320 = sld [smem:[#allocation3 + $0x5]]
          %v1321 = vstv %s1320
          %v1322 = vmul.f32 %v1321, %v288
          %v1323 = vadd.f32 %v1322, 0.0
          %s1324 = sld [smem:[#allocation3 + $0x36]]
          %v1325 = vstv %s1324
          %v1326 = vmul.f32 %v1325, %v289
          %v1327 = vadd.f32 %v1326, 0.0
          %s1328 = sld [smem:[#allocation3 + $0xc]]
          %v1329 = vstv %s1328
          %v1330 = vmul.f32 %v1329, %v288
          %1332 = vrot.lane.b32.xlu0 %v1330, 112
          %v1333 = vpop.permute.xlu0 %1332
          %v1334 = vrot.slane %v1333, 1
          %v1335 = vsel %vm310, %v1333, %v1334
          %v1337 = vadd.f32 %v1323, %v1335
          %s1338 = sld [smem:[#allocation3 + $0x3d]]
          %v1339 = vstv %s1338
          %v1340 = vmul.f32 %v1339, %v289
          %1342 = vrot.lane.b32.xlu0 %v1340, 112
          %v1343 = vpop.permute.xlu0 %1342
          %v1344 = vrot.slane %v1343, 1
          %v1345 = vsel %vm310, %v1343, %v1344
          %v1347 = vadd.f32 %v1327, %v1345
          %s1348 = sld [smem:[#allocation3 + $0x13]]
          %v1349 = vstv %s1348
          %v1350 = vmul.f32 %v1349, %v288
          %1352 = vrot.lane.b32.xlu0 %v1350, 96
          %v1353 = vpop.permute.xlu0 %1352
          %v1354 = vrot.slane %v1353, 1
          %v1355 = vsel %vm331, %v1353, %v1354
          %v1357 = vadd.f32 %v1337, %v1355
          %s1358 = sld [smem:[#allocation3 + $0x44]]
          %v1359 = vstv %s1358
          %v1360 = vmul.f32 %v1359, %v289
          %1362 = vrot.lane.b32.xlu0 %v1360, 96
          %v1363 = vpop.permute.xlu0 %1362
          %v1364 = vrot.slane %v1363, 1
          %v1365 = vsel %vm331, %v1363, %v1364
          %v1367 = vadd.f32 %v1347, %v1365
          %s1368 = sld [smem:[#allocation3 + $0x1a]]
          %v1369 = vstv %s1368
          %1370 = vrot.lane.b32.xlu0 %v288, 126
          %v1371 = vpop.permute.xlu0 %1370
          %v1372 = vrot.slane %v1371, 1
          %v1373 = vrot.slane %v1371, 2
          %v1374 = vsel %vm919, %v1372, %v1373
          %v1376 = vmul.f32 %v1369, %v1374
          %1378 = vrot.lane.b32.xlu0 %v1376, 82
          %v1379 = vpop.permute.xlu0 %1378
          %v1380 = vrot.slane %v1379, 7
          %v1381 = vsel %vm644, %v1380, %v1379
          %v1383 = vadd.f32 %v1357, %v1381
          %s1384 = sld [smem:[#allocation3 + $0x4b]]
          %v1385 = vstv %s1384
          %1386 = vrot.lane.b32.xlu0 %v289, 126
          %v1387 = vpop.permute.xlu0 %1386
          %v1388 = vrot.slane %v1387, 1
          %v1389 = vrot.slane %v1387, 2
          %v1390 = vsel %vm919, %v1388, %v1389
          %v1392 = vmul.f32 %v1385, %v1390
          %1394 = vrot.lane.b32.xlu0 %v1392, 82
          %v1395 = vpop.permute.xlu0 %1394
          %v1396 = vrot.slane %v1395, 7
          %v1397 = vsel %vm644, %v1396, %v1395
          %v1399 = vadd.f32 %v1367, %v1397
          %s1400 = sld [smem:[#allocation3 + $0x21]]
          %v1401 = vstv %s1400
          %1402 = vrot.lane.b32.xlu0 %v288, 110
          %v1403 = vpop.permute.xlu0 %1402
          %v1404 = vrot.slane %v1403, 1
          %v1405 = vrot.slane %v1403, 2
          %vm1406 = vcmask 900096
          %v1407 = vsel %vm1406, %v1404, %v1405
          %v1409 = vmul.f32 %v1401, %v1407
          %1411 = vrot.lane.b32.xlu0 %v1409, 82
          %v1412 = vpop.permute.xlu0 %1411
          %v1413 = vrot.slane %v1412, 7
          %v1414 = vsel %vm644, %v1413, %v1412
          %v1416 = vadd.f32 %v1383, %v1414
          %s1417 = sld [smem:[#allocation3 + $0x52]]
          %v1418 = vstv %s1417
          %1419 = vrot.lane.b32.xlu0 %v289, 110
          %v1420 = vpop.permute.xlu0 %1419
          %v1421 = vrot.slane %v1420, 1
          %v1422 = vrot.slane %v1420, 2
          %v1423 = vsel %vm1406, %v1421, %v1422
          %v1425 = vmul.f32 %v1418, %v1423
          %1427 = vrot.lane.b32.xlu0 %v1425, 82
          %v1428 = vpop.permute.xlu0 %1427
          %v1429 = vrot.slane %v1428, 7
          %v1430 = vsel %vm644, %v1429, %v1428
          %v1432 = vadd.f32 %v1399, %v1430
          %s1433 = sld [smem:[#allocation3 + $0x28]]
          %v1434 = vstv %s1433
          %1435 = vrot.lane.b32.xlu0 %v288, 94
          %v1436 = vpop.permute.xlu0 %1435
          %v1437 = vrot.slane %v1436, 1
          %v1438 = vrot.slane %v1436, 2
          %vm1439 = vcmask 769024
          %v1440 = vsel %vm1439, %v1437, %v1438
          %v1442 = vmul.f32 %v1434, %v1440
          %1444 = vrot.lane.b32.xlu0 %v1442, 82
          %v1445 = vpop.permute.xlu0 %1444
          %v1446 = vrot.slane %v1445, 7
          %v1447 = vsel %vm644, %v1446, %v1445
          %v1449 = vadd.f32 %v1416, %v1447
          %s1450 = sld [smem:[#allocation3 + $0x59]]
          %v1451 = vstv %s1450
          %1452 = vrot.lane.b32.xlu0 %v289, 94
          %v1453 = vpop.permute.xlu0 %1452
          %v1454 = vrot.slane %v1453, 1
          %v1455 = vrot.slane %v1453, 2
          %v1456 = vsel %vm1439, %v1454, %v1455
          %v1458 = vmul.f32 %v1451, %v1456
          %1460 = vrot.lane.b32.xlu0 %v1458, 82
          %v1461 = vpop.permute.xlu0 %1460
          %v1462 = vrot.slane %v1461, 7
          %v1463 = vsel %vm644, %v1462, %v1461
          %v1465 = vadd.f32 %v1432, %v1463
          %s1466 = sld [smem:[#allocation3 + $0x2f]]
          %v1467 = vstv %s1466
          %1468 = vrot.lane.b32.xlu0 %v288, 78
          %v1469 = vpop.permute.xlu0 %1468
          %v1470 = vrot.slane %v1469, 1
          %v1471 = vrot.slane %v1469, 2
          %v1472 = vsel %vm585, %v1470, %v1471
          %v1474 = vmul.f32 %v1467, %v1472
          %1476 = vrot.lane.b32.xlu0 %v1474, 82
          %v1477 = vpop.permute.xlu0 %1476
          %v1478 = vrot.slane %v1477, 7
          %v1479 = vsel %vm644, %v1478, %v1477
          %v1481 = vadd.f32 %v1449, %v1479
          %s1482 = sld [smem:[#allocation3 + $0x60]]
          %v1483 = vstv %s1482
          %1484 = vrot.lane.b32.xlu0 %v289, 78
          %v1485 = vpop.permute.xlu0 %1484
          %v1486 = vrot.slane %v1485, 1
          %v1487 = vrot.slane %v1485, 2
          %v1488 = vsel %vm585, %v1486, %v1487
          %v1490 = vmul.f32 %v1483, %v1488
          %1492 = vrot.lane.b32.xlu0 %v1490, 82
          %v1493 = vpop.permute.xlu0 %1492
          %v1494 = vrot.slane %v1493, 7
          %v1495 = vsel %vm644, %v1494, %v1493
          %v1497 = vadd.f32 %v1465, %v1495
          %v1498 = vadd.f32 %v1481, %v1497
          %vm1499 = vcmp.ge.s32.totalorder %v293, 4294967294
          %vm1500 = vcmp.ge.s32.totalorder %v294, 4294967294
          %vm1501 = vcmp.lt.s32.totalorder %v293, 14
          %vm1502 = vcmp.lt.s32.totalorder %v294, 14
          %vm1503 = vmand %vm1499, %vm1501
          %vm1504 = vmand %vm1500, %vm1502
          %v1505 = vsel %vm1503, 1, 0
          %v1506 = vsel %vm1504, 1, 0
          %v1507 = vcvt.s32.f32 %v1505
          %v1508 = vcvt.s32.f32 %v1506
          %v1511 = vcombine.low %v1507, %v1508
          %v1513 = vunpack.c.l.s4 1966171168
          %v1514 = vunpack.c.0.s8 %v1513
          %v1515 = vlaneseq
          %v1516 = vshrl.u32 %v1515, 7
          %v1517 = vsub.s32 %v1514, %v1516
          %v1518 = vrot.slane %v1511, %v1517
          %v1520 = vunpack.c.l.s4 1966171168
          %v1521 = vunpack.c.0.s8 %v1520
          %v1522 = vlaneseq
          %v1523 = vshrl.u32 %v1522, 7
          %v1524 = vsub.s32 %v1521, %v1523
          %v1525 = vrot.slane %v1518, %v1524
          %1526 = vrot.lane.b32.xlu0 %v1525, 82
          %v1527 = vpop.permute.xlu0 %1526
          %v1528 = vrot.slane %v1527, 7
          %v1529 = vsel %vm644, %v1528, %v1527
          %v1531 = vmul.f32 %v1498, %v1529
          %1533 = vrot.lane.b32.xlu0 %v1531, 123
          %v1534 = vpop.permute.xlu0 %1533
          %v1535 = vrot.slane %v1534, 1
          %vm1536 = vcmask 1006592
          %v1537 = vsel %vm1536, %v1534, %v1535
          %v1539 = vadd.f32 %v1319, %v1537
          %s1540 = sld [smem:[#allocation3 + $0x6]]
          %v1541 = vstv %s1540
          %v1542 = vmul.f32 %v1541, %v288
          %v1543 = vadd.f32 %v1542, 0.0
          %s1544 = sld [smem:[#allocation3 + $0x37]]
          %v1545 = vstv %s1544
          %v1546 = vmul.f32 %v1545, %v289
          %v1547 = vadd.f32 %v1546, 0.0
          %s1548 = sld [smem:[#allocation3 + $0xd]]
          %v1549 = vstv %s1548
          %v1550 = vmul.f32 %v1549, %v288
          %1552 = vrot.lane.b32.xlu0 %v1550, 112
          %v1553 = vpop.permute.xlu0 %1552
          %v1554 = vrot.slane %v1553, 1
          %v1555 = vsel %vm310, %v1553, %v1554
          %v1557 = vadd.f32 %v1543, %v1555
          %s1558 = sld [smem:[#allocation3 + $0x3e]]
          %v1559 = vstv %s1558
          %v1560 = vmul.f32 %v1559, %v289
          %1562 = vrot.lane.b32.xlu0 %v1560, 112
          %v1563 = vpop.permute.xlu0 %1562
          %v1564 = vrot.slane %v1563, 1
          %v1565 = vsel %vm310, %v1563, %v1564
          %v1567 = vadd.f32 %v1547, %v1565
          %s1568 = sld [smem:[#allocation3 + $0x14]]
          %v1569 = vstv %s1568
          %v1570 = vmul.f32 %v1569, %v288
          %1572 = vrot.lane.b32.xlu0 %v1570, 96
          %v1573 = vpop.permute.xlu0 %1572
          %v1574 = vrot.slane %v1573, 1
          %v1575 = vsel %vm331, %v1573, %v1574
          %v1577 = vadd.f32 %v1557, %v1575
          %s1578 = sld [smem:[#allocation3 + $0x45]]
          %v1579 = vstv %s1578
          %v1580 = vmul.f32 %v1579, %v289
          %1582 = vrot.lane.b32.xlu0 %v1580, 96
          %v1583 = vpop.permute.xlu0 %1582
          %v1584 = vrot.slane %v1583, 1
          %v1585 = vsel %vm331, %v1583, %v1584
          %v1587 = vadd.f32 %v1567, %v1585
          %s1588 = sld [smem:[#allocation3 + $0x1b]]
          %v1589 = vstv %s1588
          %1590 = vrot.lane.b32.xlu0 %v288, 125
          %v1591 = vpop.permute.xlu0 %1590
          %v1592 = vrot.slane %v1591, 1
          %v1593 = vrot.slane %v1591, 2
          %v1594 = vsel %vm1096, %v1592, %v1593
          %v1596 = vmul.f32 %v1589, %v1594
          %1598 = vrot.lane.b32.xlu0 %v1596, 83
          %v1599 = vpop.permute.xlu0 %1598
          %v1600 = vrot.slane %v1599, 7
          %v1601 = vsel %vm441, %v1600, %v1599
          %v1603 = vadd.f32 %v1577, %v1601
          %s1604 = sld [smem:[#allocation3 + $0x4c]]
          %v1605 = vstv %s1604
          %1606 = vrot.lane.b32.xlu0 %v289, 125
          %v1607 = vpop.permute.xlu0 %1606
          %v1608 = vrot.slane %v1607, 1
          %v1609 = vrot.slane %v1607, 2
          %v1610 = vsel %vm1096, %v1608, %v1609
          %v1612 = vmul.f32 %v1605, %v1610
          %1614 = vrot.lane.b32.xlu0 %v1612, 83
          %v1615 = vpop.permute.xlu0 %1614
          %v1616 = vrot.slane %v1615, 7
          %v1617 = vsel %vm441, %v1616, %v1615
          %v1619 = vadd.f32 %v1587, %v1617
          %s1620 = sld [smem:[#allocation3 + $0x22]]
          %v1621 = vstv %s1620
          %1622 = vrot.lane.b32.xlu0 %v288, 109
          %v1623 = vpop.permute.xlu0 %1622
          %v1624 = vrot.slane %v1623, 1
          %v1625 = vrot.slane %v1623, 2
          %vm1626 = vcmask 891904
          %v1627 = vsel %vm1626, %v1624, %v1625
          %v1629 = vmul.f32 %v1621, %v1627
          %1631 = vrot.lane.b32.xlu0 %v1629, 83
          %v1632 = vpop.permute.xlu0 %1631
          %v1633 = vrot.slane %v1632, 7
          %v1634 = vsel %vm441, %v1633, %v1632
          %v1636 = vadd.f32 %v1603, %v1634
          %s1637 = sld [smem:[#allocation3 + $0x53]]
          %v1638 = vstv %s1637
          %1639 = vrot.lane.b32.xlu0 %v289, 109
          %v1640 = vpop.permute.xlu0 %1639
          %v1641 = vrot.slane %v1640, 1
          %v1642 = vrot.slane %v1640, 2
          %v1643 = vsel %vm1626, %v1641, %v1642
          %v1645 = vmul.f32 %v1638, %v1643
          %1647 = vrot.lane.b32.xlu0 %v1645, 83
          %v1648 = vpop.permute.xlu0 %1647
          %v1649 = vrot.slane %v1648, 7
          %v1650 = vsel %vm441, %v1649, %v1648
          %v1652 = vadd.f32 %v1619, %v1650
          %s1653 = sld [smem:[#allocation3 + $0x29]]
          %v1654 = vstv %s1653
          %1655 = vrot.lane.b32.xlu0 %v288, 93
          %v1656 = vpop.permute.xlu0 %1655
          %v1657 = vrot.slane %v1656, 1
          %v1658 = vrot.slane %v1656, 2
          %vm1659 = vcmask 760832
          %v1660 = vsel %vm1659, %v1657, %v1658
          %v1662 = vmul.f32 %v1654, %v1660
          %1664 = vrot.lane.b32.xlu0 %v1662, 83
          %v1665 = vpop.permute.xlu0 %1664
          %v1666 = vrot.slane %v1665, 7
          %v1667 = vsel %vm441, %v1666, %v1665
          %v1669 = vadd.f32 %v1636, %v1667
          %s1670 = sld [smem:[#allocation3 + $0x5a]]
          %v1671 = vstv %s1670
          %1672 = vrot.lane.b32.xlu0 %v289, 93
          %v1673 = vpop.permute.xlu0 %1672
          %v1674 = vrot.slane %v1673, 1
          %v1675 = vrot.slane %v1673, 2
          %v1676 = vsel %vm1659, %v1674, %v1675
          %v1678 = vmul.f32 %v1671, %v1676
          %1680 = vrot.lane.b32.xlu0 %v1678, 83
          %v1681 = vpop.permute.xlu0 %1680
          %v1682 = vrot.slane %v1681, 7
          %v1683 = vsel %vm441, %v1682, %v1681
          %v1685 = vadd.f32 %v1652, %v1683
          %s1686 = sld [smem:[#allocation3 + $0x30]]
          %v1687 = vstv %s1686
          %1688 = vrot.lane.b32.xlu0 %v288, 77
          %v1689 = vpop.permute.xlu0 %1688
          %v1690 = vrot.slane %v1689, 1
          %v1691 = vrot.slane %v1689, 2
          %v1692 = vsel %vm381, %v1690, %v1691
          %v1694 = vmul.f32 %v1687, %v1692
          %1696 = vrot.lane.b32.xlu0 %v1694, 83
          %v1697 = vpop.permute.xlu0 %1696
          %v1698 = vrot.slane %v1697, 7
          %v1699 = vsel %vm441, %v1698, %v1697
          %v1701 = vadd.f32 %v1669, %v1699
          %s1702 = sld [smem:[#allocation3 + $0x61]]
          %v1703 = vstv %s1702
          %1704 = vrot.lane.b32.xlu0 %v289, 77
          %v1705 = vpop.permute.xlu0 %1704
          %v1706 = vrot.slane %v1705, 1
          %v1707 = vrot.slane %v1705, 2
          %v1708 = vsel %vm381, %v1706, %v1707
          %v1710 = vmul.f32 %v1703, %v1708
          %1712 = vrot.lane.b32.xlu0 %v1710, 83
          %v1713 = vpop.permute.xlu0 %1712
          %v1714 = vrot.slane %v1713, 7
          %v1715 = vsel %vm441, %v1714, %v1713
          %v1717 = vadd.f32 %v1685, %v1715
          %v1718 = vadd.f32 %v1701, %v1717
          %vm1719 = vcmp.ge.s32.totalorder %v293, 4294967293
          %vm1720 = vcmp.ge.s32.totalorder %v294, 4294967293
          %vm1721 = vcmp.lt.s32.totalorder %v293, 13
          %vm1722 = vcmp.lt.s32.totalorder %v294, 13
          %vm1723 = vmand %vm1719, %vm1721
          %vm1724 = vmand %vm1720, %vm1722
          %v1725 = vsel %vm1723, 1, 0
          %v1726 = vsel %vm1724, 1, 0
          %v1727 = vcvt.s32.f32 %v1725
          %v1728 = vcvt.s32.f32 %v1726
          %v1731 = vcombine.low %v1727, %v1728
          %v1733 = vunpack.c.l.s4 1966171168
          %v1734 = vunpack.c.0.s8 %v1733
          %v1735 = vlaneseq
          %v1736 = vshrl.u32 %v1735, 7
          %v1737 = vsub.s32 %v1734, %v1736
          %v1738 = vrot.slane %v1731, %v1737
          %v1740 = vunpack.c.l.s4 1966171168
          %v1741 = vunpack.c.0.s8 %v1740
          %v1742 = vlaneseq
          %v1743 = vshrl.u32 %v1742, 7
          %v1744 = vsub.s32 %v1741, %v1743
          %v1745 = vrot.slane %v1738, %v1744
          %1746 = vrot.lane.b32.xlu0 %v1745, 83
          %v1747 = vpop.permute.xlu0 %1746
          %v1748 = vrot.slane %v1747, 7
          %v1749 = vsel %vm441, %v1748, %v1747
          %v1751 = vmul.f32 %v1718, %v1749
          %1753 = vrot.lane.b32.xlu0 %v1751, 122
          %v1754 = vpop.permute.xlu0 %1753
          %v1755 = vrot.slane %v1754, 1
          %vm1756 = vcmask 998400
          %v1757 = vsel %vm1756, %v1754, %v1755
          %v1759 = vadd.f32 %v1539, %v1757
          %v1760 = vxor.u32 %v1759, 2147483648
          %v1761 = vmul.f32 %v1760, 1.442695
          %v1762 = vpow.pop %v1761
          %v1763 = vadd.f32 %v1762, 1.0
          %v1764 = vrcp.pop %v1763
          %v1765 = vmul.f32 1.0, %v1764
          %1767 = vrot.lane.b32.xlu0 %v1765, 51
          %v1768 = vpop.permute.xlu0 %1767
          %v1769 = vrot.slane %v1768, 1
          %vm1770 = vcmask 416768
          %v1771 = vsel %vm1770, %v1768, %v1769
          %1773 = vst.msk [vmem:[%s187] sm:$0x3] %vm247, %v1771
        $region44: #{tpu_custom_call.1} parent=27 // pred_fallthru
          _
        %s1774 = sand.u32 %s89, 1
        %s1775 = scalar_lea.sflag [#allocation5], %s1774
        %s1776 = sand.u32 %s89, 1
        %s1777 = smul.addr %s1776, 2
        %s1778 = scalar_lea.vmem [#allocation8], %s1777
        // Predicated region
        $region45: #{tpu_custom_call.1} parent=27 // pred_check
          %p1779 = pneg %p99
        $region46: #{tpu_custom_call.1} parent=27 // pred_check_branch
          %1781 = sbr.rel (%p1779) target = $region48
        $region47: #{tpu_custom_call.1} parent=27 // pred_region
          %s1783 = ssub.s32 32, 32
          %1784 = vsyncadd %s1775, %s1783
          %s1785 = smul.addr %s24, 2
          %s1786 = smul.addr %s1785, 16
          %s1787 = scalar_lea.hbm %s2, %s1786
          %s1789 = sshll.u32 %s1778, 4
          %s1790 = int_to_ptr.vmem [resolvable:$true] %s1789
          %1792 = dma.vmem_to_hbm [thread:$0]  %s1790, 32, %s1787, %s1775
        $region48: #{tpu_custom_call.1} parent=27 // pred_fallthru
          _
      $region28: #{tpu_custom_call.1} parent=5 // pred_fallthru
        _
      %p1793 = scmp.le.s32.totalorder 2, %s15
      // Predicated region
      $region49: #{tpu_custom_call.1} parent=5 // pred_check
        %p1794 = pneg %p1793
      $region50: #{tpu_custom_call.1} parent=5 // pred_check_branch
        %1796 = sbr.rel (%p1794) target = $region52
      $region51: #{tpu_custom_call.1} parent=5 // pred_region
        %s1797 = ssub.s32 %s15, 2
        // Predicated region
        $region53: #{tpu_custom_call.1} parent=51 // pred_check
          %p1798 = pneg %p105
        $region54: #{tpu_custom_call.1} parent=51 // pred_check_branch
          %1800 = sbr.rel (%p1798) target = $region56
        $region55: #{tpu_custom_call.1} parent=51 // pred_region
          %s1801 = sand.u32 %s90, 1
          %s1802 = scalar_lea.sflag [#allocation5], %s1801
          %s1803 = sand.u32 %s90, 1
          %s1804 = smul.addr %s1803, 2
          %s1805 = scalar_lea.vmem [#allocation8], %s1804
          %1806 = dma.done %s1802, 32
        $region56: #{tpu_custom_call.1} parent=51 // pred_fallthru
          _
      $region52: #{tpu_custom_call.1} parent=5 // pred_fallthru
        _
    $region6: #{tpu_custom_call.1} parent=1 // loop_footer
      %s19 = sadd.s32 1, %s15
    $region7: #{tpu_custom_call.1} parent=1 // loop_footer_branch
      %14 = sbr.rel target = $region3
    $region8: #{tpu_custom_call.1} parent=1 // loop_exit
      _
    %1807 = vsyncpa [#allocation4], 1
    %s1808 = scalar_lea.sflag [#allocation4], 1
    %1809 = vsyncpa %s1808, 1
    %1810 = vsyncpa [#allocation5], 1
    %s1811 = scalar_lea.sflag [#allocation5], 1
    %1812 = vsyncpa %s1811, 1
    %1813 = vsyncpa [#allocation6], 1
    %s1814 = scalar_lea.sflag [#allocation6], 1
    %1815 = vsyncpa %s1814, 1

</llo_original>
